<compile_context>
chip_gen: v7x
topology: tpu7x:2x2x1
jax: 0.10.0
libtpu: 0.0.40
codegen_flags: <defaults>
</compile_context>

<pallas_src>
import numpy as np

import jax
import jax.numpy as jnp
from jax import lax
from jax.experimental import pallas as pl
from jax.experimental.pallas import tpu as pltpu


# ----------------------------------------------------------------------------
# Model configuration (mirrors the constructed module)
# ----------------------------------------------------------------------------
OBJ_DIM, COL_DIM, CON_DIM = 5, 3, 2
NUM_CHANNELS = OBJ_DIM + COL_DIM + CON_DIM + 1   # 11
WIDTH = HEIGHT = 7
FEAT_CH = 32
HIDDEN = 256
NUM_ACTIONS = 7
FC_IN = 1 * 1 * FEAT_CH + OBJ_DIM + COL_DIM      # 40 (matches module fc_in_size)


# ----------------------------------------------------------------------------
# PyTorch weight-layout converters (see correctness concerns in the review)
# ----------------------------------------------------------------------------
def torch_conv_weight_to_hwio(w_oihw):
    """PyTorch Conv2d weight (Cout, Cin, kh, kw) -> HWIO (kh, kw, Cin, Cout)."""
    return jnp.transpose(jnp.asarray(w_oihw), (2, 3, 1, 0))


def torch_linear_weight(w_out_in):
    """PyTorch Linear weight (out, in) -> (in, out)."""
    return jnp.transpose(jnp.asarray(w_out_in), (1, 0))


# ----------------------------------------------------------------------------
# Parameter init (HWIO conv weights; random values, biases exercised)
# ----------------------------------------------------------------------------
def init_params(key):
    ks = list(jax.random.split(key, 24))
    it = iter(ks)

    def w(shape, s=0.1):
        return jax.random.normal(next(it), shape, jnp.float32) * s

    p = {}
    p["embed_object"] = w((11, OBJ_DIM))
    p["embed_color"] = w((6, COL_DIM))
    p["embed_contains"] = w((4, CON_DIM))
    # padding conv: 4x4, 11 -> 11, no padding (width is odd)
    p["pad_w"] = w((4, 4, NUM_CHANNELS, NUM_CHANNELS))
    p["pad_b"] = w((NUM_CHANNELS,), 0.01)
    cin = NUM_CHANNELS
    for i in range(5):  # feat_extract: 5x (3x3, stride 2, pad 1) + ELU
        p[f"conv{i}_w"] = w((3, 3, cin, FEAT_CH))
        p[f"conv{i}_b"] = w((FEAT_CH,), 0.01)
        cin = FEAT_CH
    p["fc1_w"] = w((FC_IN, HIDDEN))
    p["fc1_b"] = w((1, HIDDEN), 0.01)
    p["fc2_w"] = w((HIDDEN, HIDDEN))
    p["fc2_b"] = w((1, HIDDEN), 0.01)
    p["actor_w"] = w((HIDDEN, NUM_ACTIONS))
    p["actor_b"] = w((1, NUM_ACTIONS), 0.01)
    p["critic_w"] = w((HIDDEN, 1))
    p["critic_b"] = w((1, 1), 0.01)
    return p


# ----------------------------------------------------------------------------
# Fold a conv into the equivalent dense map on flattened (H*W*C) vectors
# ----------------------------------------------------------------------------
def _conv_to_dense(w_hwio, b, hin, win, stride, pad):
    """Exactly-equivalent dense (Hin*Win*Cin, Hout*Wout*Cout) matrix + bias."""
    w = np.asarray(w_hwio, np.float32)
    kh, kw, ci, co = w.shape
    hout = (hin + 2 * pad - kh) // stride + 1
    wout = (win + 2 * pad - kw) // stride + 1
    dense = np.zeros((hin * win * ci, hout * wout * co), np.float32)
    for oi in range(hout):
        for oj in range(wout):
            ocol = (oi * wout + oj) * co
            for di in range(kh):
                for dj in range(kw):
                    ii = oi * stride + di - pad
                    jj = oj * stride + dj - pad
                    if 0 <= ii < hin and 0 <= jj < win:
                        irow = (ii * win + jj) * ci
                        dense[irow:irow + ci, ocol:ocol + co] += w[di, dj]
                    # taps landing on the zero padding contribute nothing
    bias = np.tile(np.asarray(b, np.float32).reshape(co), hout * wout)
    return dense, bias[None, :], hout, wout


_FUSED_WEIGHT_KEYS = (
    "w_pad", "b_pad",
    "w_c0", "b_c0", "w_c1", "b_c1", "w_c2", "b_c2", "w_c3", "b_c3", "w_c4", "b_c4",
    "w_fc1_feat", "w_fc1_carry", "b_fc1",
    "w_fc2", "b_fc2",
    "w_ac", "b_ac",
)


def prepare_fused_params(p):
    """One-time weight preprocessing for the fused kernel."""
    f = {
        "embed_object": p["embed_object"],
        "embed_color": p["embed_color"],
        "embed_contains": p["embed_contains"],
    }
    dense, bias, h, w_ = _conv_to_dense(p["pad_w"], p["pad_b"], HEIGHT, WIDTH,
                                        stride=1, pad=0)           # (539, 176)
    f["w_pad"], f["b_pad"] = jnp.asarray(dense), jnp.asarray(bias)
    for i in range(5):
        dense, bias, h, w_ = _conv_to_dense(p[f"conv{i}_w"], p[f"conv{i}_b"],
                                            h, w_, stride=2, pad=1)
        f[f"w_c{i}"], f[f"b_c{i}"] = jnp.asarray(dense), jnp.asarray(bias)
    assert (h, w_) == (1, 1)
    # fc1 split so the [feat | carried] concat becomes two matmuls in-kernel.
    f["w_fc1_feat"] = p["fc1_w"][:FEAT_CH, :]     # (32, 256)
    f["w_fc1_carry"] = p["fc1_w"][FEAT_CH:, :]    # (8, 256)
    f["b_fc1"] = p["fc1_b"]
    f["w_fc2"], f["b_fc2"] = p["fc2_w"], p["fc2_b"]
    # actor + critic fused into a single (256, 8) head.
    f["w_ac"] = jnp.concatenate([p["actor_w"], p["critic_w"]], axis=1)
    f["b_ac"] = jnp.concatenate([p["actor_b"], p["critic_b"]], axis=1)
    return f


# ----------------------------------------------------------------------------
# The single fused Pallas kernel
# ----------------------------------------------------------------------------
def _fused_forward_kernel(
    x_ref, carry_ref,
    w_pad_ref, b_pad_ref,
    w_c0_ref, b_c0_ref, w_c1_ref, b_c1_ref, w_c2_ref, b_c2_ref,
    w_c3_ref, b_c3_ref, w_c4_ref, b_c4_ref,
    w_fc1f_ref, w_fc1c_ref, b_fc1_ref,
    w_fc2_ref, b_fc2_ref,
    w_ac_ref, b_ac_ref,
    o_ref,
):
    def dense(a, w_ref, b_ref):
        return jnp.dot(a, w_ref[...], preferred_element_type=jnp.float32) + b_ref[...]

    def elu(y):
        # ELU(alpha=1); clamp the exp argument so the discarded where branch
        # never overflows.
        return jnp.where(y > 0.0, y, jnp.exp(jnp.minimum(y, 0.0)) - 1.0)

    # "padding" conv (4x4, no activation) + 5x [conv + ELU], all pre-folded to
    # dense matrices over the flattened feature map -> a plain matmul chain.
    h = dense(x_ref[...], w_pad_ref, b_pad_ref)      # (bm, 176)  == 4x4x11
    h = elu(dense(h, w_c0_ref, b_c0_ref))            # (bm, 128)  == 2x2x32
    h = elu(dense(h, w_c1_ref, b_c1_ref))            # (bm, 32)   == 1x1x32
    h = elu(dense(h, w_c2_ref, b_c2_ref))            # (bm, 32)
    h = elu(dense(h, w_c3_ref, b_c3_ref))            # (bm, 32)
    h = elu(dense(h, w_c4_ref, b_c4_ref))            # (bm, 32)

    # fc1 over [feat | carried_obj_emb | carried_col_emb]: concat folded into
    # two matmuls against the split fc1 weight (no lane concat needed).
    h = (jnp.dot(h, w_fc1f_ref[...], preferred_element_type=jnp.float32)
         + jnp.dot(carry_ref[...], w_fc1c_ref[...], preferred_element_type=jnp.float32)
         + b_fc1_ref[...])
    h = jnp.maximum(h, 0.0)                          # (bm, 256)
    h = jnp.maximum(dense(h, w_fc2_ref, b_fc2_ref), 0.0)  # (bm, 256)

    # Actor + critic in one (256, 8) matmul: cols 0..6 = logits, col 7 = value.
    ac = dense(h, w_ac_ref, b_ac_ref)                # (bm, 8)
    col = lax.broadcasted_iota(jnp.int32, ac.shape, 1)
    is_logit = col < NUM_ACTIONS
    m = jnp.max(jnp.where(is_logit, ac, -jnp.inf), axis=1, keepdims=True)
    e = jnp.where(is_logit, jnp.exp(ac - m), 0.0)
    lse = jnp.log(jnp.sum(e, axis=1, keepdims=True))
    # cols 0..6 -> log_softmax(logits) (Categorical log-probs); col 7 -> value.
    o_ref[...] = jnp.where(is_logit, ac - m - lse, ac)


def fused_forward(fparams, x_flat, carried):
    """x_flat: (B, 7*7*11) float32; carried: (B, 8) float32 -> (B, 8)."""
    B, k_in = x_flat.shape
    k_carry = carried.shape[1]
    # 256-row batch tiles when batching (one full MXU tile for fc2 on v6e/v7x);
    # a single full-B block otherwise.
    block_b = B if B <= 256 else 256
    bp = ((B + block_b - 1) // block_b) * block_b
    if bp != B:
        x_flat = jnp.pad(x_flat, ((0, bp - B), (0, 0)))
        carried = jnp.pad(carried, ((0, bp - B), (0, 0)))
    weights = [fparams[k] for k in _FUSED_WEIGHT_KEYS]

    def row_spec(cols):
        return pl.BlockSpec((block_b, cols), lambda i: (i, 0))

    def full_spec(a):
        return pl.BlockSpec(a.shape, lambda i: (0, 0))

    out = pl.pallas_call(
        _fused_forward_kernel,
        out_shape=jax.ShapeDtypeStruct((bp, NUM_ACTIONS + 1), jnp.float32),
        grid=(bp // block_b,),
        in_specs=[row_spec(k_in), row_spec(k_carry)] + [full_spec(w) for w in weights],
        out_specs=pl.BlockSpec((block_b, NUM_ACTIONS + 1), lambda i: (i, 0)),
        compiler_params=pltpu.CompilerParams(dimension_semantics=("parallel",)),
    )(x_flat, carried, *weights)
    return out[:B]


# ----------------------------------------------------------------------------
# Forward wrapper (embedding gathers / one-hot are XLA layout glue)
# ----------------------------------------------------------------------------
@jax.jit
def amigo_forward(fparams, image, carried_obj, carried_col, goal):
    """image: (B, 7, 7, 3) int; carried_obj / carried_col / goal: (B,) int.

    Returns (log_probs (B, 7), value (B,)). use_memory / use_text are False.
    """
    B = image.shape[0]
    obj_emb = fparams["embed_object"][image[..., 0]]     # (B, 7, 7, 5)
    col_emb = fparams["embed_color"][image[..., 1]]      # (B, 7, 7, 3)
    con_emb = fparams["embed_contains"][image[..., 2]]   # (B, 7, 7, 2)
    goal_oh = jax.nn.one_hot(goal, WIDTH * HEIGHT, dtype=jnp.float32)
    goal_oh = goal_oh.reshape(B, WIDTH, HEIGHT, 1)       # PyTorch (W, H) order; W == H
    x = jnp.concatenate([obj_emb, col_emb, con_emb, goal_oh], axis=-1)
    x_flat = x.astype(jnp.float32).reshape(B, -1)        # (B, 539)
    carried = jnp.concatenate(
        [fparams["embed_object"][carried_obj], fparams["embed_color"][carried_col]],
        axis=1)                                          # (B, 8)

    # TODO(synk): use_memory (LSTMCell) / use_text (GRU) branches are disabled
    # in the constructed module (use_memory=False, use_text=False).
    out = fused_forward(fparams, x_flat, carried)        # (B, 8)
    return out[:, :NUM_ACTIONS], out[:, NUM_ACTIONS]


# ----------------------------------------------------------------------------
# Pure-XLA reference (lax convs) to validate the dense-folded fused kernel
# ----------------------------------------------------------------------------
def reference_forward(params, image, carried_obj, carried_col, goal):
    B = image.shape[0]
    obj_emb = params["embed_object"][image[..., 0]]
    col_emb = params["embed_color"][image[..., 1]]
    con_emb = params["embed_contains"][image[..., 2]]
    goal_oh = jax.nn.one_hot(goal, WIDTH * HEIGHT, dtype=jnp.float32)
    goal_oh = goal_oh.reshape(B, WIDTH, HEIGHT, 1)
    x = jnp.concatenate([obj_emb, col_emb, con_emb, goal_oh], axis=-1).astype(jnp.float32)

    def conv(x, w, b, stride, pad):
        y = lax.conv_general_dilated(
            x, w, (stride, stride), [(pad, pad), (pad, pad)],
            dimension_numbers=("NHWC", "HWIO", "NHWC"))
        return y + b.reshape(1, 1, 1, -1)

    def elu(y):
        return jnp.where(y > 0.0, y, jnp.exp(jnp.minimum(y, 0.0)) - 1.0)

    x = conv(x, params["pad_w"], params["pad_b"], 1, 0)
    for i in range(5):
        x = elu(conv(x, params[f"conv{i}_w"], params[f"conv{i}_b"], 2, 1))
    feat = x.reshape(B, -1)                               # (B, 32), spatial is 1x1
    union = jnp.concatenate(
        [feat, params["embed_object"][carried_obj], params["embed_color"][carried_col]],
        axis=1)
    h = jnp.maximum(union @ params["fc1_w"] + params["fc1_b"], 0.0)
    h = jnp.maximum(h @ params["fc2_w"] + params["fc2_b"], 0.0)
    logits = h @ params["actor_w"] + params["actor_b"]
    value = (h @ params["critic_w"] + params["critic_b"])[:, 0]
    return jax.nn.log_softmax(logits, axis=1), value


if __name__ == "__main__":
    key = jax.random.PRNGKey(0)
    kp, k1, k2, k3, k4, k5, k6 = jax.random.split(key, 7)

    params = init_params(kp)
    fused_params = prepare_fused_params(params)

    B = 2
    img_obj = jax.random.randint(k1, (B, WIDTH, HEIGHT), 0, 11)
    img_col = jax.random.randint(k2, (B, WIDTH, HEIGHT), 0, 6)
    img_con = jax.random.randint(k3, (B, WIDTH, HEIGHT), 0, 4)
    image = jnp.stack([img_obj, img_col, img_con], axis=-1).astype(jnp.int32)  # (2,7,7,3)
    carried_obj = jax.random.randint(k4, (B,), 0, 11).astype(jnp.int32)
    carried_col = jax.random.randint(k5, (B,), 0, 6).astype(jnp.int32)
    goal = jax.random.randint(k6, (B,), 0, WIDTH * HEIGHT).astype(jnp.int32)

    log_probs, value = amigo_forward(fused_params, image, carried_obj, carried_col, goal)
    jax.block_until_ready((log_probs, value))

    # Shape / normalization checks
    assert log_probs.shape == (B, NUM_ACTIONS)
    assert value.shape == (B,)
    assert jnp.allclose(jnp.exp(log_probs).sum(axis=1), 1.0, atol=1e-4)

    # Cross-check fused kernel against the pure-XLA reference (loose tolerance
    # to allow for MXU vs XLA matmul precision differences).
    ref_lp, ref_v = reference_forward(params, image, carried_obj, carried_col, goal)
    assert jnp.allclose(log_probs, ref_lp, atol=2e-2, rtol=2e-2)
    assert jnp.allclose(value, ref_v, atol=2e-2, rtol=2e-2)

    print("KERNEL_OK")
</pallas_src>

<mosaic_0001>
module attributes {stable_mosaic.version = 11 : i64} {
  func.func @_fused_forward_kernel(%arg0: i32, %arg1: memref<2x539xf32, #tpu.memory_space<vmem>>, %arg2: memref<2x8xf32, #tpu.memory_space<vmem>>, %arg3: memref<539x176xf32, #tpu.memory_space<vmem>>, %arg4: memref<1x176xf32, #tpu.memory_space<vmem>>, %arg5: memref<176x128xf32, #tpu.memory_space<vmem>>, %arg6: memref<1x128xf32, #tpu.memory_space<vmem>>, %arg7: memref<128x32xf32, #tpu.memory_space<vmem>>, %arg8: memref<1x32xf32, #tpu.memory_space<vmem>>, %arg9: memref<32x32xf32, #tpu.memory_space<vmem>>, %arg10: memref<1x32xf32, #tpu.memory_space<vmem>>, %arg11: memref<32x32xf32, #tpu.memory_space<vmem>>, %arg12: memref<1x32xf32, #tpu.memory_space<vmem>>, %arg13: memref<32x32xf32, #tpu.memory_space<vmem>>, %arg14: memref<1x32xf32, #tpu.memory_space<vmem>>, %arg15: memref<32x256xf32, #tpu.memory_space<vmem>>, %arg16: memref<8x256xf32, #tpu.memory_space<vmem>>, %arg17: memref<1x256xf32, #tpu.memory_space<vmem>>, %arg18: memref<256x256xf32, #tpu.memory_space<vmem>>, %arg19: memref<1x256xf32, #tpu.memory_space<vmem>>, %arg20: memref<256x8xf32, #tpu.memory_space<vmem>>, %arg21: memref<1x8xf32, #tpu.memory_space<vmem>>, %arg22: memref<2x8xf32, #tpu.memory_space<vmem>>) attributes {dimension_semantics = [#tpu.dimension_semantics<parallel>], iteration_bounds = array<i64: 1>, scalar_prefetch = 0 : i64, scratch_operands = 0 : i64, tpu.core_type = #tpu.core_type<tc>, window_params = [{transform_indices = @transform_0, window_bounds = array<i64: 2, 539>}, {transform_indices = @transform_1, window_bounds = array<i64: 2, 8>}, {pipeline_mode = #tpu.pipeline_mode<synchronous>, transform_indices = @transform_2, window_bounds = array<i64: 539, 176>}, {pipeline_mode = #tpu.pipeline_mode<synchronous>, transform_indices = @transform_3, window_bounds = array<i64: 1, 176>}, {pipeline_mode = #tpu.pipeline_mode<synchronous>, transform_indices = @transform_4, window_bounds = array<i64: 176, 128>}, {pipeline_mode = #tpu.pipeline_mode<synchronous>, transform_indices = @transform_5, window_bounds = array<i64: 1, 128>}, {pipeline_mode = #tpu.pipeline_mode<synchronous>, transform_indices = @transform_6, window_bounds = array<i64: 128, 32>}, {pipeline_mode = #tpu.pipeline_mode<synchronous>, transform_indices = @transform_7, window_bounds = array<i64: 1, 32>}, {pipeline_mode = #tpu.pipeline_mode<synchronous>, transform_indices = @transform_8, window_bounds = array<i64: 32, 32>}, {pipeline_mode = #tpu.pipeline_mode<synchronous>, transform_indices = @transform_9, window_bounds = array<i64: 1, 32>}, {pipeline_mode = #tpu.pipeline_mode<synchronous>, transform_indices = @transform_10, window_bounds = array<i64: 32, 32>}, {pipeline_mode = #tpu.pipeline_mode<synchronous>, transform_indices = @transform_11, window_bounds = array<i64: 1, 32>}, {pipeline_mode = #tpu.pipeline_mode<synchronous>, transform_indices = @transform_12, window_bounds = array<i64: 32, 32>}, {pipeline_mode = #tpu.pipeline_mode<synchronous>, transform_indices = @transform_13, window_bounds = array<i64: 1, 32>}, {pipeline_mode = #tpu.pipeline_mode<synchronous>, transform_indices = @transform_14, window_bounds = array<i64: 32, 256>}, {pipeline_mode = #tpu.pipeline_mode<synchronous>, transform_indices = @transform_15, window_bounds = array<i64: 8, 256>}, {pipeline_mode = #tpu.pipeline_mode<synchronous>, transform_indices = @transform_16, window_bounds = array<i64: 1, 256>}, {pipeline_mode = #tpu.pipeline_mode<synchronous>, transform_indices = @transform_17, window_bounds = array<i64: 256, 256>}, {pipeline_mode = #tpu.pipeline_mode<synchronous>, transform_indices = @transform_18, window_bounds = array<i64: 1, 256>}, {pipeline_mode = #tpu.pipeline_mode<synchronous>, transform_indices = @transform_19, window_bounds = array<i64: 256, 8>}, {pipeline_mode = #tpu.pipeline_mode<synchronous>, transform_indices = @transform_20, window_bounds = array<i64: 1, 8>}, {transform_indices = @transform_21, window_bounds = array<i64: 2, 8>}]} {
    %c0 = arith.constant 0 : index
    %c0_0 = arith.constant 0 : index
    %0 = vector.load %arg1[%c0, %c0_0] : memref<2x539xf32, #tpu.memory_space<vmem>>, vector<2x539xf32>
    %c0_1 = arith.constant 0 : index
    %c0_2 = arith.constant 0 : index
    %1 = vector.load %arg3[%c0_1, %c0_2] : memref<539x176xf32, #tpu.memory_space<vmem>>, vector<539x176xf32>
    %cst = arith.constant dense<0.000000e+00> : vector<2x176xf32>
    %2 = tpu.matmul %0, %1, %cst {dimension_numbers = #tpu.dot_dimension_numbers<[1], [0], [0], [1], [0, 0, 1, 1], [], []>} : vector<2x539xf32>, vector<539x176xf32>, vector<2x176xf32> -> vector<2x176xf32>
    %c0_3 = arith.constant 0 : index
    %c0_4 = arith.constant 0 : index
    %3 = vector.load %arg4[%c0_3, %c0_4] : memref<1x176xf32, #tpu.memory_space<vmem>>, vector<1x176xf32>
    %4 = vector.broadcast %3 : vector<1x176xf32> to vector<2x176xf32>
    %5 = arith.addf %2, %4 : vector<2x176xf32>
    %c0_5 = arith.constant 0 : index
    %c0_6 = arith.constant 0 : index
    %6 = vector.load %arg5[%c0_5, %c0_6] : memref<176x128xf32, #tpu.memory_space<vmem>>, vector<176x128xf32>
    %cst_7 = arith.constant dense<0.000000e+00> : vector<2x128xf32>
    %7 = tpu.matmul %5, %6, %cst_7 {dimension_numbers = #tpu.dot_dimension_numbers<[1], [0], [0], [1], [0, 0, 1, 1], [], []>} : vector<2x176xf32>, vector<176x128xf32>, vector<2x128xf32> -> vector<2x128xf32>
    %c0_8 = arith.constant 0 : index
    %c0_9 = arith.constant 0 : index
    %8 = vector.load %arg6[%c0_8, %c0_9] : memref<1x128xf32, #tpu.memory_space<vmem>>, vector<1x128xf32>
    %9 = vector.broadcast %8 : vector<1x128xf32> to vector<2x128xf32>
    %10 = arith.addf %7, %9 : vector<2x128xf32>
    %cst_10 = arith.constant 0.000000e+00 : f32
    %11 = vector.broadcast %cst_10 : f32 to vector<2x128xf32>
    %12 = arith.cmpf ogt, %10, %11 : vector<2x128xf32>
    %cst_11 = arith.constant 0.000000e+00 : f32
    %13 = vector.broadcast %cst_11 : f32 to vector<2x128xf32>
    %14 = arith.minimumf %10, %13 : vector<2x128xf32>
    %15 = math.exp %14 : vector<2x128xf32>
    %cst_12 = arith.constant 1.000000e+00 : f32
    %16 = vector.broadcast %cst_12 : f32 to vector<2x128xf32>
    %17 = arith.subf %15, %16 : vector<2x128xf32>
    %18 = arith.select %12, %10, %17 : vector<2x128xi1>, vector<2x128xf32>
    %c0_13 = arith.constant 0 : index
    %c0_14 = arith.constant 0 : index
    %19 = vector.load %arg7[%c0_13, %c0_14] : memref<128x32xf32, #tpu.memory_space<vmem>>, vector<128x32xf32>
    %cst_15 = arith.constant dense<0.000000e+00> : vector<2x32xf32>
    %20 = tpu.matmul %18, %19, %cst_15 {dimension_numbers = #tpu.dot_dimension_numbers<[1], [0], [0], [1], [0, 0, 1, 1], [], []>} : vector<2x128xf32>, vector<128x32xf32>, vector<2x32xf32> -> vector<2x32xf32>
    %c0_16 = arith.constant 0 : index
    %c0_17 = arith.constant 0 : index
    %21 = vector.load %arg8[%c0_16, %c0_17] : memref<1x32xf32, #tpu.memory_space<vmem>>, vector<1x32xf32>
    %22 = vector.broadcast %21 : vector<1x32xf32> to vector<2x32xf32>
    %23 = arith.addf %20, %22 : vector<2x32xf32>
    %cst_18 = arith.constant 0.000000e+00 : f32
    %24 = vector.broadcast %cst_18 : f32 to vector<2x32xf32>
    %25 = arith.cmpf ogt, %23, %24 : vector<2x32xf32>
    %cst_19 = arith.constant 0.000000e+00 : f32
    %26 = vector.broadcast %cst_19 : f32 to vector<2x32xf32>
    %27 = arith.minimumf %23, %26 : vector<2x32xf32>
    %28 = math.exp %27 : vector<2x32xf32>
    %cst_20 = arith.constant 1.000000e+00 : f32
    %29 = vector.broadcast %cst_20 : f32 to vector<2x32xf32>
    %30 = arith.subf %28, %29 : vector<2x32xf32>
    %31 = arith.select %25, %23, %30 : vector<2x32xi1>, vector<2x32xf32>
    %c0_21 = arith.constant 0 : index
    %c0_22 = arith.constant 0 : index
    %32 = vector.load %arg9[%c0_21, %c0_22] : memref<32x32xf32, #tpu.memory_space<vmem>>, vector<32x32xf32>
    %cst_23 = arith.constant dense<0.000000e+00> : vector<2x32xf32>
    %33 = tpu.matmul %31, %32, %cst_23 {dimension_numbers = #tpu.dot_dimension_numbers<[1], [0], [0], [1], [0, 0, 1, 1], [], []>} : vector<2x32xf32>, vector<32x32xf32>, vector<2x32xf32> -> vector<2x32xf32>
    %c0_24 = arith.constant 0 : index
    %c0_25 = arith.constant 0 : index
    %34 = vector.load %arg10[%c0_24, %c0_25] : memref<1x32xf32, #tpu.memory_space<vmem>>, vector<1x32xf32>
    %35 = vector.broadcast %34 : vector<1x32xf32> to vector<2x32xf32>
    %36 = arith.addf %33, %35 : vector<2x32xf32>
    %cst_26 = arith.constant 0.000000e+00 : f32
    %37 = vector.broadcast %cst_26 : f32 to vector<2x32xf32>
    %38 = arith.cmpf ogt, %36, %37 : vector<2x32xf32>
    %cst_27 = arith.constant 0.000000e+00 : f32
    %39 = vector.broadcast %cst_27 : f32 to vector<2x32xf32>
    %40 = arith.minimumf %36, %39 : vector<2x32xf32>
    %41 = math.exp %40 : vector<2x32xf32>
    %cst_28 = arith.constant 1.000000e+00 : f32
    %42 = vector.broadcast %cst_28 : f32 to vector<2x32xf32>
    %43 = arith.subf %41, %42 : vector<2x32xf32>
    %44 = arith.select %38, %36, %43 : vector<2x32xi1>, vector<2x32xf32>
    %c0_29 = arith.constant 0 : index
    %c0_30 = arith.constant 0 : index
    %45 = vector.load %arg11[%c0_29, %c0_30] : memref<32x32xf32, #tpu.memory_space<vmem>>, vector<32x32xf32>
    %cst_31 = arith.constant dense<0.000000e+00> : vector<2x32xf32>
    %46 = tpu.matmul %44, %45, %cst_31 {dimension_numbers = #tpu.dot_dimension_numbers<[1], [0], [0], [1], [0, 0, 1, 1], [], []>} : vector<2x32xf32>, vector<32x32xf32>, vector<2x32xf32> -> vector<2x32xf32>
    %c0_32 = arith.constant 0 : index
    %c0_33 = arith.constant 0 : index
    %47 = vector.load %arg12[%c0_32, %c0_33] : memref<1x32xf32, #tpu.memory_space<vmem>>, vector<1x32xf32>
    %48 = vector.broadcast %47 : vector<1x32xf32> to vector<2x32xf32>
    %49 = arith.addf %46, %48 : vector<2x32xf32>
    %cst_34 = arith.constant 0.000000e+00 : f32
    %50 = vector.broadcast %cst_34 : f32 to vector<2x32xf32>
    %51 = arith.cmpf ogt, %49, %50 : vector<2x32xf32>
    %cst_35 = arith.constant 0.000000e+00 : f32
    %52 = vector.broadcast %cst_35 : f32 to vector<2x32xf32>
    %53 = arith.minimumf %49, %52 : vector<2x32xf32>
    %54 = math.exp %53 : vector<2x32xf32>
    %cst_36 = arith.constant 1.000000e+00 : f32
    %55 = vector.broadcast %cst_36 : f32 to vector<2x32xf32>
    %56 = arith.subf %54, %55 : vector<2x32xf32>
    %57 = arith.select %51, %49, %56 : vector<2x32xi1>, vector<2x32xf32>
    %c0_37 = arith.constant 0 : index
    %c0_38 = arith.constant 0 : index
    %58 = vector.load %arg13[%c0_37, %c0_38] : memref<32x32xf32, #tpu.memory_space<vmem>>, vector<32x32xf32>
    %cst_39 = arith.constant dense<0.000000e+00> : vector<2x32xf32>
    %59 = tpu.matmul %57, %58, %cst_39 {dimension_numbers = #tpu.dot_dimension_numbers<[1], [0], [0], [1], [0, 0, 1, 1], [], []>} : vector<2x32xf32>, vector<32x32xf32>, vector<2x32xf32> -> vector<2x32xf32>
    %c0_40 = arith.constant 0 : index
    %c0_41 = arith.constant 0 : index
    %60 = vector.load %arg14[%c0_40, %c0_41] : memref<1x32xf32, #tpu.memory_space<vmem>>, vector<1x32xf32>
    %61 = vector.broadcast %60 : vector<1x32xf32> to vector<2x32xf32>
    %62 = arith.addf %59, %61 : vector<2x32xf32>
    %cst_42 = arith.constant 0.000000e+00 : f32
    %63 = vector.broadcast %cst_42 : f32 to vector<2x32xf32>
    %64 = arith.cmpf ogt, %62, %63 : vector<2x32xf32>
    %cst_43 = arith.constant 0.000000e+00 : f32
    %65 = vector.broadcast %cst_43 : f32 to vector<2x32xf32>
    %66 = arith.minimumf %62, %65 : vector<2x32xf32>
    %67 = math.exp %66 : vector<2x32xf32>
    %cst_44 = arith.constant 1.000000e+00 : f32
    %68 = vector.broadcast %cst_44 : f32 to vector<2x32xf32>
    %69 = arith.subf %67, %68 : vector<2x32xf32>
    %70 = arith.select %64, %62, %69 : vector<2x32xi1>, vector<2x32xf32>
    %c0_45 = arith.constant 0 : index
    %c0_46 = arith.constant 0 : index
    %71 = vector.load %arg15[%c0_45, %c0_46] : memref<32x256xf32, #tpu.memory_space<vmem>>, vector<32x256xf32>
    %cst_47 = arith.constant dense<0.000000e+00> : vector<2x256xf32>
    %72 = tpu.matmul %70, %71, %cst_47 {dimension_numbers = #tpu.dot_dimension_numbers<[1], [0], [0], [1], [0, 0, 1, 1], [], []>} : vector<2x32xf32>, vector<32x256xf32>, vector<2x256xf32> -> vector<2x256xf32>
    %c0_48 = arith.constant 0 : index
    %c0_49 = arith.constant 0 : index
    %73 = vector.load %arg2[%c0_48, %c0_49] : memref<2x8xf32, #tpu.memory_space<vmem>>, vector<2x8xf32>
    %c0_50 = arith.constant 0 : index
    %c0_51 = arith.constant 0 : index
    %74 = vector.load %arg16[%c0_50, %c0_51] : memref<8x256xf32, #tpu.memory_space<vmem>>, vector<8x256xf32>
    %cst_52 = arith.constant dense<0.000000e+00> : vector<2x256xf32>
    %75 = tpu.matmul %73, %74, %cst_52 {dimension_numbers = #tpu.dot_dimension_numbers<[1], [0], [0], [1], [0, 0, 1, 1], [], []>} : vector<2x8xf32>, vector<8x256xf32>, vector<2x256xf32> -> vector<2x256xf32>
    %76 = arith.addf %72, %75 : vector<2x256xf32>
    %c0_53 = arith.constant 0 : index
    %c0_54 = arith.constant 0 : index
    %77 = vector.load %arg17[%c0_53, %c0_54] : memref<1x256xf32, #tpu.memory_space<vmem>>, vector<1x256xf32>
    %78 = vector.broadcast %77 : vector<1x256xf32> to vector<2x256xf32>
    %79 = arith.addf %76, %78 : vector<2x256xf32>
    %cst_55 = arith.constant 0.000000e+00 : f32
    %80 = vector.broadcast %cst_55 : f32 to vector<2x256xf32>
    %81 = arith.maximumf %79, %80 : vector<2x256xf32>
    %c0_56 = arith.constant 0 : index
    %c0_57 = arith.constant 0 : index
    %82 = vector.load %arg18[%c0_56, %c0_57] : memref<256x256xf32, #tpu.memory_space<vmem>>, vector<256x256xf32>
    %cst_58 = arith.constant dense<0.000000e+00> : vector<2x256xf32>
    %83 = tpu.matmul %81, %82, %cst_58 {dimension_numbers = #tpu.dot_dimension_numbers<[1], [0], [0], [1], [0, 0, 1, 1], [], []>} : vector<2x256xf32>, vector<256x256xf32>, vector<2x256xf32> -> vector<2x256xf32>
    %c0_59 = arith.constant 0 : index
    %c0_60 = arith.constant 0 : index
    %84 = vector.load %arg19[%c0_59, %c0_60] : memref<1x256xf32, #tpu.memory_space<vmem>>, vector<1x256xf32>
    %85 = vector.broadcast %84 : vector<1x256xf32> to vector<2x256xf32>
    %86 = arith.addf %83, %85 : vector<2x256xf32>
    %cst_61 = arith.constant 0.000000e+00 : f32
    %87 = vector.broadcast %cst_61 : f32 to vector<2x256xf32>
    %88 = arith.maximumf %86, %87 : vector<2x256xf32>
    %c0_62 = arith.constant 0 : index
    %c0_63 = arith.constant 0 : index
    %89 = vector.load %arg20[%c0_62, %c0_63] : memref<256x8xf32, #tpu.memory_space<vmem>>, vector<256x8xf32>
    %cst_64 = arith.constant dense<0.000000e+00> : vector<2x8xf32>
    %90 = tpu.matmul %88, %89, %cst_64 {dimension_numbers = #tpu.dot_dimension_numbers<[1], [0], [0], [1], [0, 0, 1, 1], [], []>} : vector<2x256xf32>, vector<256x8xf32>, vector<2x8xf32> -> vector<2x8xf32>
    %c0_65 = arith.constant 0 : index
    %c0_66 = arith.constant 0 : index
    %91 = vector.load %arg21[%c0_65, %c0_66] : memref<1x8xf32, #tpu.memory_space<vmem>>, vector<1x8xf32>
    %92 = vector.broadcast %91 : vector<1x8xf32> to vector<2x8xf32>
    %93 = arith.addf %90, %92 : vector<2x8xf32>
    %94 = tpu.iota {dimensions = array<i32: 1>} : vector<2x8xi32>
    %c7_i32 = arith.constant 7 : i32
    %95 = vector.broadcast %c7_i32 : i32 to vector<2x8xi32>
    %96 = arith.cmpi slt, %94, %95 : vector<2x8xi32>
    %cst_67 = arith.constant 0xFF800000 : f32
    %97 = vector.broadcast %cst_67 : f32 to vector<2x8xf32>
    %98 = arith.select %96, %93, %97 : vector<2x8xi1>, vector<2x8xf32>
    %cst_68 = arith.constant dense<0xFF800000> : vector<2xf32>
    %99 = vector.multi_reduction <maximumf>, %98, %cst_68 [1] : vector<2x8xf32> to vector<2xf32>
    %100 = vector.shape_cast %99 : vector<2xf32> to vector<2x1xf32>
    %101 = vector.broadcast %100 : vector<2x1xf32> to vector<2x8xf32>
    %102 = arith.subf %93, %101 : vector<2x8xf32>
    %103 = math.exp %102 : vector<2x8xf32>
    %cst_69 = arith.constant 0.000000e+00 : f32
    %104 = vector.broadcast %cst_69 : f32 to vector<2x8xf32>
    %105 = arith.select %96, %103, %104 : vector<2x8xi1>, vector<2x8xf32>
    %cst_70 = arith.constant dense<0.000000e+00> : vector<2xf32>
    %106 = vector.multi_reduction <add>, %105, %cst_70 [1] : vector<2x8xf32> to vector<2xf32>
    %107 = vector.shape_cast %106 : vector<2xf32> to vector<2x1xf32>
    %108 = math.log %107 : vector<2x1xf32>
    %109 = vector.broadcast %100 : vector<2x1xf32> to vector<2x8xf32>
    %110 = arith.subf %93, %109 : vector<2x8xf32>
    %111 = vector.broadcast %108 : vector<2x1xf32> to vector<2x8xf32>
    %112 = arith.subf %110, %111 : vector<2x8xf32>
    %113 = arith.select %96, %112, %93 : vector<2x8xi1>, vector<2x8xf32>
    %c0_71 = arith.constant 0 : index
    %c0_72 = arith.constant 0 : index
    %114 = vector.load %arg22[%c0_71, %c0_72] : memref<2x8xf32, #tpu.memory_space<vmem>>, vector<2x8xf32>
    tpu.vector_store %arg22[%c0_71, %c0_72], %113 {strides = array<i32>} : memref<2x8xf32, #tpu.memory_space<vmem>>, vector<2x8xf32>,
    return
  }
  func.func @transform_0(%arg0: i32) -> (i32, i32) {
    %c0_i32 = arith.constant 0 : i32
    %c0_i32_0 = arith.constant 0 : i32
    return %arg0, %c0_i32 : i32, i32
  }
  func.func @transform_1(%arg0: i32) -> (i32, i32) {
    %c0_i32 = arith.constant 0 : i32
    %c0_i32_0 = arith.constant 0 : i32
    return %arg0, %c0_i32 : i32, i32
  }
  func.func @transform_2(%arg0: i32) -> (i32, i32) {
    %c0_i32 = arith.constant 0 : i32
    %c0_i32_0 = arith.constant 0 : i32
    %c0_i32_1 = arith.constant 0 : i32
    return %c0_i32, %c0_i32_0 : i32, i32
  }
  func.func @transform_3(%arg0: i32) -> (i32, i32) {
    %c0_i32 = arith.constant 0 : i32
    %c0_i32_0 = arith.constant 0 : i32
    %c0_i32_1 = arith.constant 0 : i32
    return %c0_i32, %c0_i32_0 : i32, i32
  }
  func.func @transform_4(%arg0: i32) -> (i32, i32) {
    %c0_i32 = arith.constant 0 : i32
    %c0_i32_0 = arith.constant 0 : i32
    %c0_i32_1 = arith.constant 0 : i32
    return %c0_i32, %c0_i32_0 : i32, i32
  }
  func.func @transform_5(%arg0: i32) -> (i32, i32) {
    %c0_i32 = arith.constant 0 : i32
    %c0_i32_0 = arith.constant 0 : i32
    %c0_i32_1 = arith.constant 0 : i32
    return %c0_i32, %c0_i32_0 : i32, i32
  }
  func.func @transform_6(%arg0: i32) -> (i32, i32) {
    %c0_i32 = arith.constant 0 : i32
    %c0_i32_0 = arith.constant 0 : i32
    %c0_i32_1 = arith.constant 0 : i32
    return %c0_i32, %c0_i32_0 : i32, i32
  }
  func.func @transform_7(%arg0: i32) -> (i32, i32) {
    %c0_i32 = arith.constant 0 : i32
    %c0_i32_0 = arith.constant 0 : i32
    %c0_i32_1 = arith.constant 0 : i32
    return %c0_i32, %c0_i32_0 : i32, i32
  }
  func.func @transform_8(%arg0: i32) -> (i32, i32) {
    %c0_i32 = arith.constant 0 : i32
    %c0_i32_0 = arith.constant 0 : i32
    %c0_i32_1 = arith.constant 0 : i32
    return %c0_i32, %c0_i32_0 : i32, i32
  }
  func.func @transform_9(%arg0: i32) -> (i32, i32) {
    %c0_i32 = arith.constant 0 : i32
    %c0_i32_0 = arith.constant 0 : i32
    %c0_i32_1 = arith.constant 0 : i32
    return %c0_i32, %c0_i32_0 : i32, i32
  }
  func.func @transform_10(%arg0: i32) -> (i32, i32) {
    %c0_i32 = arith.constant 0 : i32
    %c0_i32_0 = arith.constant 0 : i32
    %c0_i32_1 = arith.constant 0 : i32
    return %c0_i32, %c0_i32_0 : i32, i32
  }
  func.func @transform_11(%arg0: i32) -> (i32, i32) {
    %c0_i32 = arith.constant 0 : i32
    %c0_i32_0 = arith.constant 0 : i32
    %c0_i32_1 = arith.constant 0 : i32
    return %c0_i32, %c0_i32_0 : i32, i32
  }
  func.func @transform_12(%arg0: i32) -> (i32, i32) {
    %c0_i32 = arith.constant 0 : i32
    %c0_i32_0 = arith.constant 0 : i32
    %c0_i32_1 = arith.constant 0 : i32
    return %c0_i32, %c0_i32_0 : i32, i32
  }
  func.func @transform_13(%arg0: i32) -> (i32, i32) {
    %c0_i32 = arith.constant 0 : i32
    %c0_i32_0 = arith.constant 0 : i32
    %c0_i32_1 = arith.constant 0 : i32
    return %c0_i32, %c0_i32_0 : i32, i32
  }
  func.func @transform_14(%arg0: i32) -> (i32, i32) {
    %c0_i32 = arith.constant 0 : i32
    %c0_i32_0 = arith.constant 0 : i32
    %c0_i32_1 = arith.constant 0 : i32
    return %c0_i32, %c0_i32_0 : i32, i32
  }
  func.func @transform_15(%arg0: i32) -> (i32, i32) {
    %c0_i32 = arith.constant 0 : i32
    %c0_i32_0 = arith.constant 0 : i32
    %c0_i32_1 = arith.constant 0 : i32
    return %c0_i32, %c0_i32_0 : i32, i32
  }
  func.func @transform_16(%arg0: i32) -> (i32, i32) {
    %c0_i32 = arith.constant 0 : i32
    %c0_i32_0 = arith.constant 0 : i32
    %c0_i32_1 = arith.constant 0 : i32
    return %c0_i32, %c0_i32_0 : i32, i32
  }
  func.func @transform_17(%arg0: i32) -> (i32, i32) {
    %c0_i32 = arith.constant 0 : i32
    %c0_i32_0 = arith.constant 0 : i32
    %c0_i32_1 = arith.constant 0 : i32
    return %c0_i32, %c0_i32_0 : i32, i32
  }
  func.func @transform_18(%arg0: i32) -> (i32, i32) {
    %c0_i32 = arith.constant 0 : i32
    %c0_i32_0 = arith.constant 0 : i32
    %c0_i32_1 = arith.constant 0 : i32
    return %c0_i32, %c0_i32_0 : i32, i32
  }
  func.func @transform_19(%arg0: i32) -> (i32, i32) {
    %c0_i32 = arith.constant 0 : i32
    %c0_i32_0 = arith.constant 0 : i32
    %c0_i32_1 = arith.constant 0 : i32
    return %c0_i32, %c0_i32_0 : i32, i32
  }
  func.func @transform_20(%arg0: i32) -> (i32, i32) {
    %c0_i32 = arith.constant 0 : i32
    %c0_i32_0 = arith.constant 0 : i32
    %c0_i32_1 = arith.constant 0 : i32
    return %c0_i32, %c0_i32_0 : i32, i32
  }
  func.func @transform_21(%arg0: i32) -> (i32, i32) {
    %c0_i32 = arith.constant 0 : i32
    %c0_i32_0 = arith.constant 0 : i32
    return %arg0, %c0_i32 : i32, i32
  }
}

</mosaic_0001>

<llo_original>
// kernel: amigo_forward.1
$region0: #{amigo_forward.1}
  #allocation0 [shape = 'u32[]', space=smem, size = 0x4, offset = 0x4, fixed_abs, tag = 'smem constant byte address 0x4 - core index']
  #allocation1 [shape = 'u32[144,128]{1,0:T(1,128)}', space=vmem, size = 0x12000, scoped, tag = 'internal scratch']
  %s0 = inlined_call_operand.vmem [shape: f32[2,539], index: 0, kind: input, shape index: {}]
  %s1 = inlined_call_operand.vmem [shape: f32[2,8], index: 1, kind: input, shape index: {}]
  %s2 = inlined_call_operand.vmem [shape: f32[539,176], index: 2, kind: input, shape index: {}]
  %s3 = inlined_call_operand.vmem [shape: f32[1,176], index: 3, kind: input, shape index: {}]
  %s4 = inlined_call_operand.vmem [shape: f32[176,128], index: 4, kind: input, shape index: {}]
  %s5 = inlined_call_operand.vmem [shape: f32[1,128], index: 5, kind: input, shape index: {}]
  %s6 = inlined_call_operand.vmem [shape: f32[128,32], index: 6, kind: input, shape index: {}]
  %s7 = inlined_call_operand.vmem [shape: f32[1,32], index: 7, kind: input, shape index: {}]
  %s8 = inlined_call_operand.vmem [shape: f32[32,32], index: 8, kind: input, shape index: {}]
  %s9 = inlined_call_operand.vmem [shape: f32[1,32], index: 9, kind: input, shape index: {}]
  %s10 = inlined_call_operand.vmem [shape: f32[32,32], index: 10, kind: input, shape index: {}]
  %s11 = inlined_call_operand.vmem [shape: f32[1,32], index: 11, kind: input, shape index: {}]
  %s12 = inlined_call_operand.vmem [shape: f32[32,32], index: 12, kind: input, shape index: {}]
  %s13 = inlined_call_operand.vmem [shape: f32[1,32], index: 13, kind: input, shape index: {}]
  %s14 = inlined_call_operand.vmem [shape: f32[32,256], index: 14, kind: input, shape index: {}]
  %s15 = inlined_call_operand.vmem [shape: f32[8,256], index: 15, kind: input, shape index: {}]
  %s16 = inlined_call_operand.vmem [shape: f32[1,256], index: 16, kind: input, shape index: {}]
  %s17 = inlined_call_operand.vmem [shape: f32[256,256], index: 17, kind: input, shape index: {}]
  %s18 = inlined_call_operand.vmem [shape: f32[1,256], index: 18, kind: input, shape index: {}]
  %s19 = inlined_call_operand.vmem [shape: f32[256,8], index: 19, kind: input, shape index: {}]
  %s20 = inlined_call_operand.vmem [shape: f32[1,8], index: 20, kind: input, shape index: {}]
  %s21 = inlined_call_operand.vmem [shape: f32[2,8], index: 21, kind: output, shape index: {}]
  %s22 = sld [smem:[#allocation0]]
  $region94: #{amigo_forward.1} parent=0
    _
  %s24 = ssub.s32 1, %s22
  %s25 = scalar_select 0, %s24, %s22
  // Predicated region
  $region2: #{amigo_forward.1} parent=0 // pred_check
    _
  $region3: #{amigo_forward.1} parent=0 // pred_check_branch
    %27 = sbr.rel (0) target = $region5
  $region4: #{amigo_forward.1} parent=0 // pred_region
    _
  $region5: #{amigo_forward.1} parent=0 // pred_fallthru
    _
  // Predicated region
  $region6: #{amigo_forward.1} parent=0 // pred_check
    _
  $region7: #{amigo_forward.1} parent=0 // pred_check_branch
    %29 = sbr.rel (0) target = $region9
  $region8: #{amigo_forward.1} parent=0 // pred_region
    _
  $region9: #{amigo_forward.1} parent=0 // pred_fallthru
    _
  // Predicated region
  $region10: #{amigo_forward.1} parent=0 // pred_check
    _
  $region11: #{amigo_forward.1} parent=0 // pred_check_branch
    %31 = sbr.rel (0) target = $region13
  $region12: #{amigo_forward.1} parent=0 // pred_region
    _
  $region13: #{amigo_forward.1} parent=0 // pred_fallthru
    _
  // Predicated region
  $region14: #{amigo_forward.1} parent=0 // pred_check
    _
  $region15: #{amigo_forward.1} parent=0 // pred_check_branch
    %33 = sbr.rel (0) target = $region17
  $region16: #{amigo_forward.1} parent=0 // pred_region
    _
  $region17: #{amigo_forward.1} parent=0 // pred_fallthru
    _
  // Predicated region
  $region18: #{amigo_forward.1} parent=0 // pred_check
    _
  $region19: #{amigo_forward.1} parent=0 // pred_check_branch
    %35 = sbr.rel (0) target = $region21
  $region20: #{amigo_forward.1} parent=0 // pred_region
    _
  $region21: #{amigo_forward.1} parent=0 // pred_fallthru
    _
  // Predicated region
  $region22: #{amigo_forward.1} parent=0 // pred_check
    _
  $region23: #{amigo_forward.1} parent=0 // pred_check_branch
    %37 = sbr.rel (0) target = $region25
  $region24: #{amigo_forward.1} parent=0 // pred_region
    _
  $region25: #{amigo_forward.1} parent=0 // pred_fallthru
    _
  // Predicated region
  $region26: #{amigo_forward.1} parent=0 // pred_check
    _
  $region27: #{amigo_forward.1} parent=0 // pred_check_branch
    %39 = sbr.rel (0) target = $region29
  $region28: #{amigo_forward.1} parent=0 // pred_region
    _
  $region29: #{amigo_forward.1} parent=0 // pred_fallthru
    _
  // Predicated region
  $region30: #{amigo_forward.1} parent=0 // pred_check
    _
  $region31: #{amigo_forward.1} parent=0 // pred_check_branch
    %41 = sbr.rel (0) target = $region33
  $region32: #{amigo_forward.1} parent=0 // pred_region
    _
  $region33: #{amigo_forward.1} parent=0 // pred_fallthru
    _
  // Predicated region
  $region34: #{amigo_forward.1} parent=0 // pred_check
    _
  $region35: #{amigo_forward.1} parent=0 // pred_check_branch
    %43 = sbr.rel (0) target = $region37
  $region36: #{amigo_forward.1} parent=0 // pred_region
    _
  $region37: #{amigo_forward.1} parent=0 // pred_fallthru
    _
  // Predicated region
  $region38: #{amigo_forward.1} parent=0 // pred_check
    _
  $region39: #{amigo_forward.1} parent=0 // pred_check_branch
    %45 = sbr.rel (0) target = $region41
  $region40: #{amigo_forward.1} parent=0 // pred_region
    _
  $region41: #{amigo_forward.1} parent=0 // pred_fallthru
    _
  // Predicated region
  $region42: #{amigo_forward.1} parent=0 // pred_check
    _
  $region43: #{amigo_forward.1} parent=0 // pred_check_branch
    %47 = sbr.rel (0) target = $region45
  $region44: #{amigo_forward.1} parent=0 // pred_region
    _
  $region45: #{amigo_forward.1} parent=0 // pred_fallthru
    _
  // Predicated region
  $region46: #{amigo_forward.1} parent=0 // pred_check
    _
  $region47: #{amigo_forward.1} parent=0 // pred_check_branch
    %49 = sbr.rel (0) target = $region49
  $region48: #{amigo_forward.1} parent=0 // pred_region
    _
  $region49: #{amigo_forward.1} parent=0 // pred_fallthru
    _
  // Predicated region
  $region50: #{amigo_forward.1} parent=0 // pred_check
    _
  $region51: #{amigo_forward.1} parent=0 // pred_check_branch
    %51 = sbr.rel (0) target = $region53
  $region52: #{amigo_forward.1} parent=0 // pred_region
    _
  $region53: #{amigo_forward.1} parent=0 // pred_fallthru
    _
  // Predicated region
  $region54: #{amigo_forward.1} parent=0 // pred_check
    _
  $region55: #{amigo_forward.1} parent=0 // pred_check_branch
    %53 = sbr.rel (0) target = $region57
  $region56: #{amigo_forward.1} parent=0 // pred_region
    _
  $region57: #{amigo_forward.1} parent=0 // pred_fallthru
    _
  // Predicated region
  $region58: #{amigo_forward.1} parent=0 // pred_check
    _
  $region59: #{amigo_forward.1} parent=0 // pred_check_branch
    %55 = sbr.rel (0) target = $region61
  $region60: #{amigo_forward.1} parent=0 // pred_region
    _
  $region61: #{amigo_forward.1} parent=0 // pred_fallthru
    _
  // Predicated region
  $region62: #{amigo_forward.1} parent=0 // pred_check
    _
  $region63: #{amigo_forward.1} parent=0 // pred_check_branch
    %57 = sbr.rel (0) target = $region65
  $region64: #{amigo_forward.1} parent=0 // pred_region
    _
  $region65: #{amigo_forward.1} parent=0 // pred_fallthru
    _
  // Predicated region
  $region66: #{amigo_forward.1} parent=0 // pred_check
    _
  $region67: #{amigo_forward.1} parent=0 // pred_check_branch
    %59 = sbr.rel (0) target = $region69
  $region68: #{amigo_forward.1} parent=0 // pred_region
    _
  $region69: #{amigo_forward.1} parent=0 // pred_fallthru
    _
  // Predicated region
  $region70: #{amigo_forward.1} parent=0 // pred_check
    _
  $region71: #{amigo_forward.1} parent=0 // pred_check_branch
    %61 = sbr.rel (0) target = $region73
  $region72: #{amigo_forward.1} parent=0 // pred_region
    _
  $region73: #{amigo_forward.1} parent=0 // pred_fallthru
    _
  // Predicated region
  $region74: #{amigo_forward.1} parent=0 // pred_check
    _
  $region75: #{amigo_forward.1} parent=0 // pred_check_branch
    %63 = sbr.rel (0) target = $region77
  $region76: #{amigo_forward.1} parent=0 // pred_region
    _
  $region77: #{amigo_forward.1} parent=0 // pred_fallthru
    _
  // Predicated region
  $region78: #{amigo_forward.1} parent=0 // pred_check
    _
  $region79: #{amigo_forward.1} parent=0 // pred_check_branch
    %65 = sbr.rel (0) target = $region81
  $region80: #{amigo_forward.1} parent=0 // pred_region
    _
  $region81: #{amigo_forward.1} parent=0 // pred_fallthru
    _
  // Predicated region
  $region82: #{amigo_forward.1} parent=0 // pred_check
    _
  $region83: #{amigo_forward.1} parent=0 // pred_check_branch
    %67 = sbr.rel (0) target = $region85
  $region84: #{amigo_forward.1} parent=0 // pred_region
    _
  $region85: #{amigo_forward.1} parent=0 // pred_fallthru
    _
  %v68 = vld [vmem:[%s0] sm:$0xff]
  %v69 = vld [vmem:[%s0 + $0x8] sm:$0x3]
  %v70 = vld [vmem:[%s2] sm:$0xff]
  %v71 = vld [vmem:[%s2 + $0x8] sm:$0xff]
  %v72 = vld [vmem:[%s2 + $0x10] sm:$0xff]
  %v73 = vld [vmem:[%s2 + $0x18] sm:$0xff]
  %v74 = vld [vmem:[%s2 + $0x20] sm:$0xff]
  %v75 = vld [vmem:[%s2 + $0x28] sm:$0xff]
  %v76 = vld [vmem:[%s2 + $0x30] sm:$0xff]
  %v77 = vld [vmem:[%s2 + $0x38] sm:$0xff]
  %v78 = vld [vmem:[%s2 + $0x40] sm:$0xff]
  %v79 = vld [vmem:[%s2 + $0x48] sm:$0xff]
  %v80 = vld [vmem:[%s2 + $0x50] sm:$0xff]
  %v81 = vld [vmem:[%s2 + $0x58] sm:$0xff]
  %v82 = vld [vmem:[%s2 + $0x60] sm:$0xff]
  %v83 = vld [vmem:[%s2 + $0x68] sm:$0xff]
  %v84 = vld [vmem:[%s2 + $0x70] sm:$0xff]
  %v85 = vld [vmem:[%s2 + $0x78] sm:$0xff]
  %v86 = vld [vmem:[%s2 + $0x80] sm:$0xff]
  %v87 = vld [vmem:[%s2 + $0x88] sm:$0xff]
  %v88 = vld [vmem:[%s2 + $0x90] sm:$0xff]
  %v89 = vld [vmem:[%s2 + $0x98] sm:$0xff]
  %v90 = vld [vmem:[%s2 + $0xa0] sm:$0xff]
  %v91 = vld [vmem:[%s2 + $0xa8] sm:$0xff]
  %v92 = vld [vmem:[%s2 + $0xb0] sm:$0xff]
  %v93 = vld [vmem:[%s2 + $0xb8] sm:$0xff]
  %v94 = vld [vmem:[%s2 + $0xc0] sm:$0xff]
  %v95 = vld [vmem:[%s2 + $0xc8] sm:$0xff]
  %v96 = vld [vmem:[%s2 + $0xd0] sm:$0xff]
  %v97 = vld [vmem:[%s2 + $0xd8] sm:$0xff]
  %v98 = vld [vmem:[%s2 + $0xe0] sm:$0xff]
  %v99 = vld [vmem:[%s2 + $0xe8] sm:$0xff]
  %v100 = vld [vmem:[%s2 + $0xf0] sm:$0xff]
  %v101 = vld [vmem:[%s2 + $0xf8] sm:$0xff]
  %v102 = vld [vmem:[%s2 + $0x100] sm:$0xff]
  %v103 = vld [vmem:[%s2 + $0x108] sm:$0xff]
  %v104 = vld [vmem:[%s2 + $0x110] sm:$0xff]
  %v105 = vld [vmem:[%s2 + $0x118] sm:$0xff]
  %v106 = vld [vmem:[%s2 + $0x120] sm:$0xff]
  %v107 = vld [vmem:[%s2 + $0x128] sm:$0xff]
  %v108 = vld [vmem:[%s2 + $0x130] sm:$0xff]
  %v109 = vld [vmem:[%s2 + $0x138] sm:$0xff]
  %v110 = vld [vmem:[%s2 + $0x140] sm:$0xff]
  %v111 = vld [vmem:[%s2 + $0x148] sm:$0xff]
  %v112 = vld [vmem:[%s2 + $0x150] sm:$0xff]
  %v113 = vld [vmem:[%s2 + $0x158] sm:$0xff]
  %v114 = vld [vmem:[%s2 + $0x160] sm:$0xff]
  %v115 = vld [vmem:[%s2 + $0x168] sm:$0xff]
  %v116 = vld [vmem:[%s2 + $0x170] sm:$0xff]
  %v117 = vld [vmem:[%s2 + $0x178] sm:$0xff]
  %v118 = vld [vmem:[%s2 + $0x180] sm:$0xff]
  %v119 = vld [vmem:[%s2 + $0x188] sm:$0xff]
  %v120 = vld [vmem:[%s2 + $0x190] sm:$0xff]
  %v121 = vld [vmem:[%s2 + $0x198] sm:$0xff]
  %v122 = vld [vmem:[%s2 + $0x1a0] sm:$0xff]
  %v123 = vld [vmem:[%s2 + $0x1a8] sm:$0xff]
  %v124 = vld [vmem:[%s2 + $0x1b0] sm:$0xff]
  %v125 = vld [vmem:[%s2 + $0x1b8] sm:$0xff]
  %v126 = vld [vmem:[%s2 + $0x1c0] sm:$0xff]
  %v127 = vld [vmem:[%s2 + $0x1c8] sm:$0xff]
  %v128 = vld [vmem:[%s2 + $0x1d0] sm:$0xff]
  %v129 = vld [vmem:[%s2 + $0x1d8] sm:$0xff]
  %v130 = vld [vmem:[%s2 + $0x1e0] sm:$0xff]
  %v131 = vld [vmem:[%s2 + $0x1e8] sm:$0xff]
  %v132 = vld [vmem:[%s2 + $0x1f0] sm:$0xff]
  %v133 = vld [vmem:[%s2 + $0x1f8] sm:$0xff]
  %v134 = vld [vmem:[%s2 + $0x200] sm:$0xff]
  %v135 = vld [vmem:[%s2 + $0x208] sm:$0xff]
  %v136 = vld [vmem:[%s2 + $0x210] sm:$0xff]
  %v137 = vld [vmem:[%s2 + $0x218] sm:$0xff]
  %v138 = vld [vmem:[%s2 + $0x220] sm:$0xff]
  %v139 = vld [vmem:[%s2 + $0x228] sm:$0xff]
  %v140 = vld [vmem:[%s2 + $0x230] sm:$0xff]
  %v141 = vld [vmem:[%s2 + $0x238] sm:$0xff]
  %v142 = vld [vmem:[%s2 + $0x240] sm:$0xff]
  %v143 = vld [vmem:[%s2 + $0x248] sm:$0xff]
  %v144 = vld [vmem:[%s2 + $0x250] sm:$0xff]
  %v145 = vld [vmem:[%s2 + $0x258] sm:$0xff]
  %v146 = vld [vmem:[%s2 + $0x260] sm:$0xff]
  %v147 = vld [vmem:[%s2 + $0x268] sm:$0xff]
  %v148 = vld [vmem:[%s2 + $0x270] sm:$0xff]
  %v149 = vld [vmem:[%s2 + $0x278] sm:$0xff]
  %v150 = vld [vmem:[%s2 + $0x280] sm:$0xff]
  %v151 = vld [vmem:[%s2 + $0x288] sm:$0xff]
  %v152 = vld [vmem:[%s2 + $0x290] sm:$0xff]
  %v153 = vld [vmem:[%s2 + $0x298] sm:$0xff]
  %v154 = vld [vmem:[%s2 + $0x2a0] sm:$0xff]
  %v155 = vld [vmem:[%s2 + $0x2a8] sm:$0xff]
  %v156 = vld [vmem:[%s2 + $0x2b0] sm:$0xff]
  %v157 = vld [vmem:[%s2 + $0x2b8] sm:$0xff]
  %v158 = vld [vmem:[%s2 + $0x2c0] sm:$0xff]
  %v159 = vld [vmem:[%s2 + $0x2c8] sm:$0xff]
  %v160 = vld [vmem:[%s2 + $0x2d0] sm:$0xff]
  %v161 = vld [vmem:[%s2 + $0x2d8] sm:$0xff]
  %v162 = vld [vmem:[%s2 + $0x2e0] sm:$0xff]
  %v163 = vld [vmem:[%s2 + $0x2e8] sm:$0xff]
  %v164 = vld [vmem:[%s2 + $0x2f0] sm:$0xff]
  %v165 = vld [vmem:[%s2 + $0x2f8] sm:$0xff]
  %v166 = vld [vmem:[%s2 + $0x300] sm:$0xff]
  %v167 = vld [vmem:[%s2 + $0x308] sm:$0xff]
  %v168 = vld [vmem:[%s2 + $0x310] sm:$0xff]
  %v169 = vld [vmem:[%s2 + $0x318] sm:$0xff]
  %v170 = vld [vmem:[%s2 + $0x320] sm:$0xff]
  %v171 = vld [vmem:[%s2 + $0x328] sm:$0xff]
  %v172 = vld [vmem:[%s2 + $0x330] sm:$0xff]
  %v173 = vld [vmem:[%s2 + $0x338] sm:$0xff]
  %v174 = vld [vmem:[%s2 + $0x340] sm:$0xff]
  %v175 = vld [vmem:[%s2 + $0x348] sm:$0xff]
  %v176 = vld [vmem:[%s2 + $0x350] sm:$0xff]
  %v177 = vld [vmem:[%s2 + $0x358] sm:$0xff]
  %v178 = vld [vmem:[%s2 + $0x360] sm:$0xff]
  %v179 = vld [vmem:[%s2 + $0x368] sm:$0xff]
  %v180 = vld [vmem:[%s2 + $0x370] sm:$0xff]
  %v181 = vld [vmem:[%s2 + $0x378] sm:$0xff]
  %v182 = vld [vmem:[%s2 + $0x380] sm:$0xff]
  %v183 = vld [vmem:[%s2 + $0x388] sm:$0xff]
  %v184 = vld [vmem:[%s2 + $0x390] sm:$0xff]
  %v185 = vld [vmem:[%s2 + $0x398] sm:$0xff]
  %v186 = vld [vmem:[%s2 + $0x3a0] sm:$0xff]
  %v187 = vld [vmem:[%s2 + $0x3a8] sm:$0xff]
  %v188 = vld [vmem:[%s2 + $0x3b0] sm:$0xff]
  %v189 = vld [vmem:[%s2 + $0x3b8] sm:$0xff]
  %v190 = vld [vmem:[%s2 + $0x3c0] sm:$0xff]
  %v191 = vld [vmem:[%s2 + $0x3c8] sm:$0xff]
  %v192 = vld [vmem:[%s2 + $0x3d0] sm:$0xff]
  %v193 = vld [vmem:[%s2 + $0x3d8] sm:$0xff]
  %v194 = vld [vmem:[%s2 + $0x3e0] sm:$0xff]
  %v195 = vld [vmem:[%s2 + $0x3e8] sm:$0xff]
  %v196 = vld [vmem:[%s2 + $0x3f0] sm:$0xff]
  %v197 = vld [vmem:[%s2 + $0x3f8] sm:$0xff]
  %v198 = vld [vmem:[%s2 + $0x400] sm:$0xff]
  %v199 = vld [vmem:[%s2 + $0x408] sm:$0xff]
  %v200 = vld [vmem:[%s2 + $0x410] sm:$0xff]
  %v201 = vld [vmem:[%s2 + $0x418] sm:$0xff]
  %v202 = vld [vmem:[%s2 + $0x420] sm:$0xff]
  %v203 = vld [vmem:[%s2 + $0x428] sm:$0xff]
  %v204 = vld [vmem:[%s2 + $0x430] sm:$0x7]
  %v205 = vld [vmem:[%s2 + $0x438] sm:$0x7]
  %v206 = vld [vmem:[%s3] sm:$0x3]
  %v208 = vlaneseq
  %v209 = vshrl.u32 %v208, 7
  %v210 = vsub.s32 0, %v209
  %v211 = vrot.slane %v206, %v210
  %v212 = vlaneseq
  %v213 = vshrl.u32 %v212, 7
  %v214 = vsub.s32 1, %v213
  %v215 = vrot.slane %v206, %v214
  %v220 = vcombine.high %v68, %v68
  %v222 = vunpack.c.l.s4 1983009808
  %v223 = vunpack.c.0.s8 %v222
  %v224 = vlaneseq
  %v225 = vshrl.u32 %v224, 7
  %v226 = vsub.s32 %v223, %v225
  %v227 = vrot.slane %v68, %v226
  %v229 = vunpack.c.l.s4 1983009808
  %v230 = vunpack.c.0.s8 %v229
  %v231 = vlaneseq
  %v232 = vshrl.u32 %v231, 7
  %v233 = vsub.s32 %v230, %v232
  %v234 = vrot.slane %v220, %v233
  %v235 = vcombine.high %v227, %v227
  %v236 = vcombine.high %v234, %v234
  %v238 = vunpack.c.l.s4 1983009808
  %v239 = vunpack.c.0.s8 %v238
  %v240 = vlaneseq
  %v241 = vshrl.u32 %v240, 7
  %v242 = vsub.s32 %v239, %v241
  %v243 = vrot.slane %v69, %v242
  %vm248 = vcmask 220160
  %v249 = vsel %vm248, %v243, 0
  %vm251 = vcmask 1042432
  %v253 = vsel %vm251, %v204, 0
  %v256 = vsel %vm251, %v205, 0
  %258 = vmatprep.subr.mxu0 %v71
  %259 = vmatpush1.msra.mxu0 %v70
  %260 = vmatprep.subr.mxu0 %v73
  %261 = vmatpush1.msra.mxu0 %v72
  %262 = vmatprep.subr.mxu0 %v75
  %263 = vmatpush1.msra.mxu0 %v74
  %264 = vmatprep.subr.mxu0 %v77
  %265 = vmatpush1.msra.mxu0 %v76
  %266 = vmatprep.subr.mxu0 %v79
  %267 = vmatpush1.msra.mxu0 %v78
  %268 = vmatprep.subr.mxu0 %v81
  %269 = vmatpush1.msra.mxu0 %v80
  %270 = vmatprep.subr.mxu0 %v83
  %271 = vmatpush1.msra.mxu0 %v82
  %272 = vmatprep.subr.mxu0 %v85
  %273 = vmatpush1.msra.mxu0 %v84
  %274 = vmatprep.subr.mxu0 %v87
  %275 = vmatpush1.msra.mxu0 %v86
  %276 = vmatprep.subr.mxu0 %v89
  %277 = vmatpush1.msra.mxu0 %v88
  %278 = vmatprep.subr.mxu0 %v91
  %279 = vmatpush1.msra.mxu0 %v90
  %280 = vmatprep.subr.mxu0 %v93
  %281 = vmatpush1.msra.mxu0 %v92
  %282 = vmatprep.subr.mxu0 %v95
  %283 = vmatpush1.msra.mxu0 %v94
  %284 = vmatprep.subr.mxu0 %v97
  %285 = vmatpush1.msra.mxu0 %v96
  %286 = vmatprep.subr.mxu0 %v99
  %287 = vmatpush1.msra.mxu0 %v98
  %288 = vmatprep.subr.mxu0 %v101
  %289 = vmatpush1.msra.mxu0 %v100
  %290 = vmatprep.subr.mxu0 %v103
  %291 = vmatpush1.msra.mxu0 %v102
  %292 = vmatprep.subr.mxu0 %v105
  %293 = vmatpush1.msra.mxu0 %v104
  %294 = vmatprep.subr.mxu0 %v107
  %295 = vmatpush1.msra.mxu0 %v106
  %296 = vmatprep.subr.mxu0 %v109
  %297 = vmatpush1.msra.mxu0 %v108
  %298 = vmatprep.subr.mxu0 %v111
  %299 = vmatpush1.msra.mxu0 %v110
  %300 = vmatprep.subr.mxu0 %v113
  %301 = vmatpush1.msra.mxu0 %v112
  %302 = vmatprep.subr.mxu0 %v115
  %303 = vmatpush1.msra.mxu0 %v114
  %304 = vmatprep.subr.mxu0 %v117
  %305 = vmatpush1.msra.mxu0 %v116
  %306 = vmatprep.subr.mxu0 %v119
  %307 = vmatpush1.msra.mxu0 %v118
  %308 = vmatprep.subr.mxu0 %v121
  %309 = vmatpush1.msra.mxu0 %v120
  %310 = vmatprep.subr.mxu0 %v123
  %311 = vmatpush1.msra.mxu0 %v122
  %312 = vmatprep.subr.mxu0 %v125
  %313 = vmatpush1.msra.mxu0 %v124
  %314 = vmatprep.subr.mxu0 %v127
  %315 = vmatpush1.msra.mxu0 %v126
  %316 = vmatprep.subr.mxu0 %v129
  %317 = vmatpush1.msra.mxu0 %v128
  %318 = vmatprep.subr.mxu0 %v131
  %319 = vmatpush1.msra.mxu0 %v130
  %320 = vmatprep.subr.mxu0 %v133
  %321 = vmatpush1.msra.mxu0 %v132
  %322 = vmatprep.mubr.f32.mxu0 %v235
  %323 = vmatmul.mubr.f32.gmra.mrb[0].mxu0 %v227
  %v324 = vpop.f32.mrb[0].mxu0
  %v325 = vadd.f32 %v211, %v324
  %v326 = vpop.f32.mrb[0].mxu0
  %v327 = vadd.f32 %v215, %v326
  %328 = vdwg.mxu0
  %329 = vmatprep.subr.mxu0 %v135
  %330 = vmatpush1.msra.mxu0 %v134
  %331 = vmatprep.subr.mxu0 %v137
  %332 = vmatpush1.msra.mxu0 %v136
  %333 = vmatprep.subr.mxu0 %v139
  %334 = vmatpush1.msra.mxu0 %v138
  %335 = vmatprep.subr.mxu0 %v141
  %336 = vmatpush1.msra.mxu0 %v140
  %337 = vmatprep.subr.mxu0 %v143
  %338 = vmatpush1.msra.mxu0 %v142
  %339 = vmatprep.subr.mxu0 %v145
  %340 = vmatpush1.msra.mxu0 %v144
  %341 = vmatprep.subr.mxu0 %v147
  %342 = vmatpush1.msra.mxu0 %v146
  %343 = vmatprep.subr.mxu0 %v149
  %344 = vmatpush1.msra.mxu0 %v148
  %345 = vmatprep.subr.mxu0 %v151
  %346 = vmatpush1.msra.mxu0 %v150
  %347 = vmatprep.subr.mxu0 %v153
  %348 = vmatpush1.msra.mxu0 %v152
  %349 = vmatprep.subr.mxu0 %v155
  %350 = vmatpush1.msra.mxu0 %v154
  %351 = vmatprep.subr.mxu0 %v157
  %352 = vmatpush1.msra.mxu0 %v156
  %353 = vmatprep.subr.mxu0 %v159
  %354 = vmatpush1.msra.mxu0 %v158
  %355 = vmatprep.subr.mxu0 %v161
  %356 = vmatpush1.msra.mxu0 %v160
  %357 = vmatprep.subr.mxu0 %v163
  %358 = vmatpush1.msra.mxu0 %v162
  %359 = vmatprep.subr.mxu0 %v165
  %360 = vmatpush1.msra.mxu0 %v164
  %361 = vmatprep.subr.mxu0 %v167
  %362 = vmatpush1.msra.mxu0 %v166
  %363 = vmatprep.subr.mxu0 %v169
  %364 = vmatpush1.msra.mxu0 %v168
  %365 = vmatprep.subr.mxu0 %v171
  %366 = vmatpush1.msra.mxu0 %v170
  %367 = vmatprep.subr.mxu0 %v173
  %368 = vmatpush1.msra.mxu0 %v172
  %369 = vmatprep.subr.mxu0 %v175
  %370 = vmatpush1.msra.mxu0 %v174
  %371 = vmatprep.subr.mxu0 %v177
  %372 = vmatpush1.msra.mxu0 %v176
  %373 = vmatprep.subr.mxu0 %v179
  %374 = vmatpush1.msra.mxu0 %v178
  %375 = vmatprep.subr.mxu0 %v181
  %376 = vmatpush1.msra.mxu0 %v180
  %377 = vmatprep.subr.mxu0 %v183
  %378 = vmatpush1.msra.mxu0 %v182
  %379 = vmatprep.subr.mxu0 %v185
  %380 = vmatpush1.msra.mxu0 %v184
  %381 = vmatprep.subr.mxu0 %v187
  %382 = vmatpush1.msra.mxu0 %v186
  %383 = vmatprep.subr.mxu0 %v189
  %384 = vmatpush1.msra.mxu0 %v188
  %385 = vmatprep.subr.mxu0 %v191
  %386 = vmatpush1.msra.mxu0 %v190
  %387 = vmatprep.subr.mxu0 %v193
  %388 = vmatpush1.msra.mxu0 %v192
  %389 = vmatprep.subr.mxu0 %v195
  %390 = vmatpush1.msra.mxu0 %v194
  %391 = vmatprep.subr.mxu0 %v197
  %392 = vmatpush1.msra.mxu0 %v196
  %393 = vmatprep.mubr.f32.mxu0 %v236
  %394 = vmatmul.mubr.f32.gmra.mrb[0].mxu0 %v234
  %v395 = vpop.f32.mrb[0].mxu0
  %v396 = vadd.f32 %v325, %v395
  %v397 = vpop.f32.mrb[0].mxu0
  %v398 = vadd.f32 %v327, %v397
  %399 = vdwg.mxu0
  %400 = vmatprep.subr.mxu0 %v199
  %401 = vmatpush1.msra.mxu0 %v198
  %402 = vmatprep.subr.mxu0 %v201
  %403 = vmatpush1.msra.mxu0 %v200
  %404 = vmatprep.subr.mxu0 %v203
  %405 = vmatpush1.msra.mxu0 %v202
  %406 = vmatprep.subr.mxu0 %v256
  %407 = vmatpush1.msra.mxu0 %v253
  %408 = vmatprep.subr.mxu0 0.0
  %409 = vmatpush1.msra.mxu0 0.0
  %410 = vmatprep.subr.mxu0 0.0
  %411 = vmatpush1.msra.mxu0 0.0
  %412 = vmatprep.subr.mxu0 0.0
  %413 = vmatpush1.msra.mxu0 0.0
  %414 = vmatprep.subr.mxu0 0.0
  %415 = vmatpush1.msra.mxu0 0.0
  %416 = vmatprep.subr.mxu0 0.0
  %417 = vmatpush1.msra.mxu0 0.0
  %418 = vmatprep.subr.mxu0 0.0
  %419 = vmatpush1.msra.mxu0 0.0
  %420 = vmatprep.subr.mxu0 0.0
  %421 = vmatpush1.msra.mxu0 0.0
  %422 = vmatprep.subr.mxu0 0.0
  %423 = vmatpush1.msra.mxu0 0.0
  %424 = vmatprep.subr.mxu0 0.0
  %425 = vmatpush1.msra.mxu0 0.0
  %426 = vmatprep.subr.mxu0 0.0
  %427 = vmatpush1.msra.mxu0 0.0
  %428 = vmatprep.subr.mxu0 0.0
  %429 = vmatpush1.msra.mxu0 0.0
  %430 = vmatprep.subr.mxu0 0.0
  %431 = vmatpush1.msra.mxu0 0.0
  %432 = vmatprep.subr.mxu0 0.0
  %433 = vmatpush1.msra.mxu0 0.0
  %434 = vmatprep.subr.mxu0 0.0
  %435 = vmatpush1.msra.mxu0 0.0
  %436 = vmatprep.subr.mxu0 0.0
  %437 = vmatpush1.msra.mxu0 0.0
  %438 = vmatprep.subr.mxu0 0.0
  %439 = vmatpush1.msra.mxu0 0.0
  %440 = vmatprep.subr.mxu0 0.0
  %441 = vmatpush1.msra.mxu0 0.0
  %442 = vmatprep.subr.mxu0 0.0
  %443 = vmatpush1.msra.mxu0 0.0
  %444 = vmatprep.subr.mxu0 0.0
  %445 = vmatpush1.msra.mxu0 0.0
  %446 = vmatprep.subr.mxu0 0.0
  %447 = vmatpush1.msra.mxu0 0.0
  %448 = vmatprep.subr.mxu0 0.0
  %449 = vmatpush1.msra.mxu0 0.0
  %450 = vmatprep.subr.mxu0 0.0
  %451 = vmatpush1.msra.mxu0 0.0
  %452 = vmatprep.subr.mxu0 0.0
  %453 = vmatpush1.msra.mxu0 0.0
  %454 = vmatprep.subr.mxu0 0.0
  %455 = vmatpush1.msra.mxu0 0.0
  %456 = vmatprep.subr.mxu0 0.0
  %457 = vmatpush1.msra.mxu0 0.0
  %458 = vmatprep.subr.mxu0 0.0
  %459 = vmatpush1.msra.mxu0 0.0
  %460 = vmatprep.subr.mxu0 0.0
  %461 = vmatpush1.msra.mxu0 0.0
  %462 = vmatprep.subr.mxu0 0.0
  %463 = vmatpush1.msra.mxu0 0.0
  %464 = vmatprep.mubr.f32.mxu0 0.0
  %465 = vmatmul.mubr.f32.gmra.mrb[0].mxu0 %v249
  %v466 = vpop.f32.mrb[0].mxu0
  %v467 = vadd.f32 %v396, %v466
  %v468 = vpop.f32.mrb[0].mxu0
  %v469 = vadd.f32 %v398, %v468
  %470 = vdwg.mxu0
  %v471 = vld [vmem:[%s4] sm:$0xff]
  %v472 = vld [vmem:[%s4 + $0x8] sm:$0xff]
  %v473 = vld [vmem:[%s4 + $0x10] sm:$0xff]
  %v474 = vld [vmem:[%s4 + $0x18] sm:$0xff]
  %v475 = vld [vmem:[%s4 + $0x20] sm:$0xff]
  %v476 = vld [vmem:[%s4 + $0x28] sm:$0xff]
  %v477 = vld [vmem:[%s4 + $0x30] sm:$0xff]
  %v478 = vld [vmem:[%s4 + $0x38] sm:$0xff]
  %v479 = vld [vmem:[%s4 + $0x40] sm:$0xff]
  %v480 = vld [vmem:[%s4 + $0x48] sm:$0xff]
  %v481 = vld [vmem:[%s4 + $0x50] sm:$0xff]
  %v482 = vld [vmem:[%s4 + $0x58] sm:$0xff]
  %v483 = vld [vmem:[%s4 + $0x60] sm:$0xff]
  %v484 = vld [vmem:[%s4 + $0x68] sm:$0xff]
  %v485 = vld [vmem:[%s4 + $0x70] sm:$0xff]
  %v486 = vld [vmem:[%s4 + $0x78] sm:$0xff]
  %v487 = vld [vmem:[%s4 + $0x80] sm:$0xff]
  %v488 = vld [vmem:[%s4 + $0x88] sm:$0xff]
  %v489 = vld [vmem:[%s4 + $0x90] sm:$0xff]
  %v490 = vld [vmem:[%s4 + $0x98] sm:$0xff]
  %v491 = vld [vmem:[%s4 + $0xa0] sm:$0xff]
  %v492 = vld [vmem:[%s4 + $0xa8] sm:$0xff]
  %v493 = vld [vmem:[%s5] sm:$0x1]
  %v495 = vlaneseq
  %v496 = vshrl.u32 %v495, 7
  %v497 = vsub.s32 0, %v496
  %v498 = vrot.slane %v493, %v497
  %vm500 = vcmask 392192
  %v502 = vsel %vm500, %v469, 0
  %504 = vmatprep.subr.mxu0 0.0
  %505 = vmatpush1.msra.mxu0 %v471
  %506 = vmatprep.subr.mxu0 0.0
  %507 = vmatpush1.msra.mxu0 %v472
  %508 = vmatprep.subr.mxu0 0.0
  %509 = vmatpush1.msra.mxu0 %v473
  %510 = vmatprep.subr.mxu0 0.0
  %511 = vmatpush1.msra.mxu0 %v474
  %512 = vmatprep.subr.mxu0 0.0
  %513 = vmatpush1.msra.mxu0 %v475
  %514 = vmatprep.subr.mxu0 0.0
  %515 = vmatpush1.msra.mxu0 %v476
  %516 = vmatprep.subr.mxu0 0.0
  %517 = vmatpush1.msra.mxu0 %v477
  %518 = vmatprep.subr.mxu0 0.0
  %519 = vmatpush1.msra.mxu0 %v478
  %520 = vmatprep.subr.mxu0 0.0
  %521 = vmatpush1.msra.mxu0 %v479
  %522 = vmatprep.subr.mxu0 0.0
  %523 = vmatpush1.msra.mxu0 %v480
  %524 = vmatprep.subr.mxu0 0.0
  %525 = vmatpush1.msra.mxu0 %v481
  %526 = vmatprep.subr.mxu0 0.0
  %527 = vmatpush1.msra.mxu0 %v482
  %528 = vmatprep.subr.mxu0 0.0
  %529 = vmatpush1.msra.mxu0 %v483
  %530 = vmatprep.subr.mxu0 0.0
  %531 = vmatpush1.msra.mxu0 %v484
  %532 = vmatprep.subr.mxu0 0.0
  %533 = vmatpush1.msra.mxu0 %v485
  %534 = vmatprep.subr.mxu0 0.0
  %535 = vmatpush1.msra.mxu0 %v486
  %536 = vmatprep.subr.mxu0 0.0
  %537 = vmatpush1.msra.mxu0 %v487
  %538 = vmatprep.subr.mxu0 0.0
  %539 = vmatpush1.msra.mxu0 %v488
  %540 = vmatprep.subr.mxu0 0.0
  %541 = vmatpush1.msra.mxu0 %v489
  %542 = vmatprep.subr.mxu0 0.0
  %543 = vmatpush1.msra.mxu0 %v490
  %544 = vmatprep.subr.mxu0 0.0
  %545 = vmatpush1.msra.mxu0 %v491
  %546 = vmatprep.subr.mxu0 0.0
  %547 = vmatpush1.msra.mxu0 %v492
  %548 = vmatprep.subr.mxu0 0.0
  %549 = vmatpush1.msra.mxu0 0.0
  %550 = vmatprep.subr.mxu0 0.0
  %551 = vmatpush1.msra.mxu0 0.0
  %552 = vmatprep.subr.mxu0 0.0
  %553 = vmatpush1.msra.mxu0 0.0
  %554 = vmatprep.subr.mxu0 0.0
  %555 = vmatpush1.msra.mxu0 0.0
  %556 = vmatprep.subr.mxu0 0.0
  %557 = vmatpush1.msra.mxu0 0.0
  %558 = vmatprep.subr.mxu0 0.0
  %559 = vmatpush1.msra.mxu0 0.0
  %560 = vmatprep.subr.mxu0 0.0
  %561 = vmatpush1.msra.mxu0 0.0
  %562 = vmatprep.subr.mxu0 0.0
  %563 = vmatpush1.msra.mxu0 0.0
  %564 = vmatprep.subr.mxu0 0.0
  %565 = vmatpush1.msra.mxu0 0.0
  %566 = vmatprep.subr.mxu0 0.0
  %567 = vmatpush1.msra.mxu0 0.0
  %568 = vmatprep.mubr.f32.mxu0 %v502
  %569 = vmatmul.mubr.f32.gmra.mrb[0].mxu0 %v467
  %v570 = vpop.f32.mrb[0].mxu0
  %v571 = vadd.f32 %v498, %v570
  %v572 = vpop.f32.mrb[0].mxu0
  %573 = vdwg.mxu0
  %vm574 = vcmp.gt.f32.partialorder %v571, 0.0
  %v575 = vmin.f32 %v571, 0.0
  %v576 = vmul.f32 %v575, 1.442695
  %v577 = vpow.pop %v576
  %v578 = vsub.f32 %v577, 1.0
  %v579 = vsel %vm574, %v571, %v578
  %v580 = vld [vmem:[%s6] sm:$0xff]
  %v581 = vld [vmem:[%s6 + $0x8] sm:$0xff]
  %v582 = vld [vmem:[%s6 + $0x10] sm:$0xff]
  %v583 = vld [vmem:[%s6 + $0x18] sm:$0xff]
  %v584 = vld [vmem:[%s6 + $0x20] sm:$0xff]
  %v585 = vld [vmem:[%s6 + $0x28] sm:$0xff]
  %v586 = vld [vmem:[%s6 + $0x30] sm:$0xff]
  %v587 = vld [vmem:[%s6 + $0x38] sm:$0xff]
  %v588 = vld [vmem:[%s6 + $0x40] sm:$0xff]
  %v589 = vld [vmem:[%s6 + $0x48] sm:$0xff]
  %v590 = vld [vmem:[%s6 + $0x50] sm:$0xff]
  %v591 = vld [vmem:[%s6 + $0x58] sm:$0xff]
  %v592 = vld [vmem:[%s6 + $0x60] sm:$0xff]
  %v593 = vld [vmem:[%s6 + $0x68] sm:$0xff]
  %v594 = vld [vmem:[%s6 + $0x70] sm:$0xff]
  %v595 = vld [vmem:[%s6 + $0x78] sm:$0xff]
  %v596 = vld [vmem:[%s7] sm:$0x1]
  %v598 = vlaneseq
  %v599 = vshrl.u32 %v598, 7
  %v600 = vsub.s32 0, %v599
  %v601 = vrot.slane %v596, %v600
  %603 = vmatprep.subr.mxu0 0.0
  %604 = vmatpush1.msra.mxu0 %v580
  %605 = vmatprep.subr.mxu0 0.0
  %606 = vmatpush1.msra.mxu0 %v581
  %607 = vmatprep.subr.mxu0 0.0
  %608 = vmatpush1.msra.mxu0 %v582
  %609 = vmatprep.subr.mxu0 0.0
  %610 = vmatpush1.msra.mxu0 %v583
  %611 = vmatprep.subr.mxu0 0.0
  %612 = vmatpush1.msra.mxu0 %v584
  %613 = vmatprep.subr.mxu0 0.0
  %614 = vmatpush1.msra.mxu0 %v585
  %615 = vmatprep.subr.mxu0 0.0
  %616 = vmatpush1.msra.mxu0 %v586
  %617 = vmatprep.subr.mxu0 0.0
  %618 = vmatpush1.msra.mxu0 %v587
  %619 = vmatprep.subr.mxu0 0.0
  %620 = vmatpush1.msra.mxu0 %v588
  %621 = vmatprep.subr.mxu0 0.0
  %622 = vmatpush1.msra.mxu0 %v589
  %623 = vmatprep.subr.mxu0 0.0
  %624 = vmatpush1.msra.mxu0 %v590
  %625 = vmatprep.subr.mxu0 0.0
  %626 = vmatpush1.msra.mxu0 %v591
  %627 = vmatprep.subr.mxu0 0.0
  %628 = vmatpush1.msra.mxu0 %v592
  %629 = vmatprep.subr.mxu0 0.0
  %630 = vmatpush1.msra.mxu0 %v593
  %631 = vmatprep.subr.mxu0 0.0
  %632 = vmatpush1.msra.mxu0 %v594
  %633 = vmatprep.subr.mxu0 0.0
  %634 = vmatpush1.msra.mxu0 %v595
  %635 = vmatprep.subr.mxu0 0.0
  %636 = vmatpush1.msra.mxu0 0.0
  %637 = vmatprep.subr.mxu0 0.0
  %638 = vmatpush1.msra.mxu0 0.0
  %639 = vmatprep.subr.mxu0 0.0
  %640 = vmatpush1.msra.mxu0 0.0
  %641 = vmatprep.subr.mxu0 0.0
  %642 = vmatpush1.msra.mxu0 0.0
  %643 = vmatprep.subr.mxu0 0.0
  %644 = vmatpush1.msra.mxu0 0.0
  %645 = vmatprep.subr.mxu0 0.0
  %646 = vmatpush1.msra.mxu0 0.0
  %647 = vmatprep.subr.mxu0 0.0
  %648 = vmatpush1.msra.mxu0 0.0
  %649 = vmatprep.subr.mxu0 0.0
  %650 = vmatpush1.msra.mxu0 0.0
  %651 = vmatprep.subr.mxu0 0.0
  %652 = vmatpush1.msra.mxu0 0.0
  %653 = vmatprep.subr.mxu0 0.0
  %654 = vmatpush1.msra.mxu0 0.0
  %655 = vmatprep.subr.mxu0 0.0
  %656 = vmatpush1.msra.mxu0 0.0
  %657 = vmatprep.subr.mxu0 0.0
  %658 = vmatpush1.msra.mxu0 0.0
  %659 = vmatprep.subr.mxu0 0.0
  %660 = vmatpush1.msra.mxu0 0.0
  %661 = vmatprep.subr.mxu0 0.0
  %662 = vmatpush1.msra.mxu0 0.0
  %663 = vmatprep.subr.mxu0 0.0
  %664 = vmatpush1.msra.mxu0 0.0
  %665 = vmatprep.subr.mxu0 0.0
  %666 = vmatpush1.msra.mxu0 0.0
  %667 = vmatprep.mubr.f32.mxu0 0.0
  %668 = vmatmul.mubr.f32.gmra.mrb[0].mxu0 %v579
  %v669 = vpop.f32.mrb[0].mxu0
  %v670 = vadd.f32 %v601, %v669
  %v671 = vpop.f32.mrb[0].mxu0
  %672 = vdwg.mxu0
  %vm673 = vcmp.gt.f32.partialorder %v670, 0.0
  %v674 = vmin.f32 %v670, 0.0
  %v675 = vmul.f32 %v674, 1.442695
  %v676 = vpow.pop %v675
  %v677 = vsub.f32 %v676, 1.0
  %v678 = vsel %vm673, %v670, %v677
  %v679 = vld [vmem:[%s8] sm:$0xff]
  %v680 = vld [vmem:[%s8 + $0x8] sm:$0xff]
  %v681 = vld [vmem:[%s8 + $0x10] sm:$0xff]
  %v682 = vld [vmem:[%s8 + $0x18] sm:$0xff]
  %v683 = vld [vmem:[%s9] sm:$0x1]
  %v685 = vlaneseq
  %v686 = vshrl.u32 %v685, 7
  %v687 = vsub.s32 0, %v686
  %v688 = vrot.slane %v683, %v687
  %vm690 = vcmask 261120
  %v692 = vsel %vm690, %v678, 0
  %694 = vmatprep.subr.mxu0 0.0
  %695 = vmatpush1.msra.mxu0 %v679
  %696 = vmatprep.subr.mxu0 0.0
  %697 = vmatpush1.msra.mxu0 %v680
  %698 = vmatprep.subr.mxu0 0.0
  %699 = vmatpush1.msra.mxu0 %v681
  %700 = vmatprep.subr.mxu0 0.0
  %701 = vmatpush1.msra.mxu0 %v682
  %702 = vmatprep.subr.mxu0 0.0
  %703 = vmatpush1.msra.mxu0 0.0
  %704 = vmatprep.subr.mxu0 0.0
  %705 = vmatpush1.msra.mxu0 0.0
  %706 = vmatprep.subr.mxu0 0.0
  %707 = vmatpush1.msra.mxu0 0.0
  %708 = vmatprep.subr.mxu0 0.0
  %709 = vmatpush1.msra.mxu0 0.0
  %710 = vmatprep.subr.mxu0 0.0
  %711 = vmatpush1.msra.mxu0 0.0
  %712 = vmatprep.subr.mxu0 0.0
  %713 = vmatpush1.msra.mxu0 0.0
  %714 = vmatprep.subr.mxu0 0.0
  %715 = vmatpush1.msra.mxu0 0.0
  %716 = vmatprep.subr.mxu0 0.0
  %717 = vmatpush1.msra.mxu0 0.0
  %718 = vmatprep.subr.mxu0 0.0
  %719 = vmatpush1.msra.mxu0 0.0
  %720 = vmatprep.subr.mxu0 0.0
  %721 = vmatpush1.msra.mxu0 0.0
  %722 = vmatprep.subr.mxu0 0.0
  %723 = vmatpush1.msra.mxu0 0.0
  %724 = vmatprep.subr.mxu0 0.0
  %725 = vmatpush1.msra.mxu0 0.0
  %726 = vmatprep.subr.mxu0 0.0
  %727 = vmatpush1.msra.mxu0 0.0
  %728 = vmatprep.subr.mxu0 0.0
  %729 = vmatpush1.msra.mxu0 0.0
  %730 = vmatprep.subr.mxu0 0.0
  %731 = vmatpush1.msra.mxu0 0.0
  %732 = vmatprep.subr.mxu0 0.0
  %733 = vmatpush1.msra.mxu0 0.0
  %734 = vmatprep.subr.mxu0 0.0
  %735 = vmatpush1.msra.mxu0 0.0
  %736 = vmatprep.subr.mxu0 0.0
  %737 = vmatpush1.msra.mxu0 0.0
  %738 = vmatprep.subr.mxu0 0.0
  %739 = vmatpush1.msra.mxu0 0.0
  %740 = vmatprep.subr.mxu0 0.0
  %741 = vmatpush1.msra.mxu0 0.0
  %742 = vmatprep.subr.mxu0 0.0
  %743 = vmatpush1.msra.mxu0 0.0
  %744 = vmatprep.subr.mxu0 0.0
  %745 = vmatpush1.msra.mxu0 0.0
  %746 = vmatprep.subr.mxu0 0.0
  %747 = vmatpush1.msra.mxu0 0.0
  %748 = vmatprep.subr.mxu0 0.0
  %749 = vmatpush1.msra.mxu0 0.0
  %750 = vmatprep.subr.mxu0 0.0
  %751 = vmatpush1.msra.mxu0 0.0
  %752 = vmatprep.subr.mxu0 0.0
  %753 = vmatpush1.msra.mxu0 0.0
  %754 = vmatprep.subr.mxu0 0.0
  %755 = vmatpush1.msra.mxu0 0.0
  %756 = vmatprep.subr.mxu0 0.0
  %757 = vmatpush1.msra.mxu0 0.0
  %758 = vmatprep.mubr.f32.mxu0 0.0
  %759 = vmatmul.mubr.f32.gmra.mrb[0].mxu0 %v692
  %v760 = vpop.f32.mrb[0].mxu0
  %v761 = vadd.f32 %v688, %v760
  %v762 = vpop.f32.mrb[0].mxu0
  %763 = vdwg.mxu0
  %vm764 = vcmp.gt.f32.partialorder %v761, 0.0
  %v765 = vmin.f32 %v761, 0.0
  %v766 = vmul.f32 %v765, 1.442695
  %v767 = vpow.pop %v766
  %v768 = vsub.f32 %v767, 1.0
  %v769 = vsel %vm764, %v761, %v768
  %v770 = vld [vmem:[%s10] sm:$0xff]
  %v771 = vld [vmem:[%s10 + $0x8] sm:$0xff]
  %v772 = vld [vmem:[%s10 + $0x10] sm:$0xff]
  %v773 = vld [vmem:[%s10 + $0x18] sm:$0xff]
  %v774 = vld [vmem:[%s11] sm:$0x1]
  %v776 = vlaneseq
  %v777 = vshrl.u32 %v776, 7
  %v778 = vsub.s32 0, %v777
  %v779 = vrot.slane %v774, %v778
  %v782 = vsel %vm690, %v769, 0
  %784 = vmatprep.subr.mxu0 0.0
  %785 = vmatpush1.msra.mxu0 %v770
  %786 = vmatprep.subr.mxu0 0.0
  %787 = vmatpush1.msra.mxu0 %v771
  %788 = vmatprep.subr.mxu0 0.0
  %789 = vmatpush1.msra.mxu0 %v772
  %790 = vmatprep.subr.mxu0 0.0
  %791 = vmatpush1.msra.mxu0 %v773
  %792 = vmatprep.subr.mxu0 0.0
  %793 = vmatpush1.msra.mxu0 0.0
  %794 = vmatprep.subr.mxu0 0.0
  %795 = vmatpush1.msra.mxu0 0.0
  %796 = vmatprep.subr.mxu0 0.0
  %797 = vmatpush1.msra.mxu0 0.0
  %798 = vmatprep.subr.mxu0 0.0
  %799 = vmatpush1.msra.mxu0 0.0
  %800 = vmatprep.subr.mxu0 0.0
  %801 = vmatpush1.msra.mxu0 0.0
  %802 = vmatprep.subr.mxu0 0.0
  %803 = vmatpush1.msra.mxu0 0.0
  %804 = vmatprep.subr.mxu0 0.0
  %805 = vmatpush1.msra.mxu0 0.0
  %806 = vmatprep.subr.mxu0 0.0
  %807 = vmatpush1.msra.mxu0 0.0
  %808 = vmatprep.subr.mxu0 0.0
  %809 = vmatpush1.msra.mxu0 0.0
  %810 = vmatprep.subr.mxu0 0.0
  %811 = vmatpush1.msra.mxu0 0.0
  %812 = vmatprep.subr.mxu0 0.0
  %813 = vmatpush1.msra.mxu0 0.0
  %814 = vmatprep.subr.mxu0 0.0
  %815 = vmatpush1.msra.mxu0 0.0
  %816 = vmatprep.subr.mxu0 0.0
  %817 = vmatpush1.msra.mxu0 0.0
  %818 = vmatprep.subr.mxu0 0.0
  %819 = vmatpush1.msra.mxu0 0.0
  %820 = vmatprep.subr.mxu0 0.0
  %821 = vmatpush1.msra.mxu0 0.0
  %822 = vmatprep.subr.mxu0 0.0
  %823 = vmatpush1.msra.mxu0 0.0
  %824 = vmatprep.subr.mxu0 0.0
  %825 = vmatpush1.msra.mxu0 0.0
  %826 = vmatprep.subr.mxu0 0.0
  %827 = vmatpush1.msra.mxu0 0.0
  %828 = vmatprep.subr.mxu0 0.0
  %829 = vmatpush1.msra.mxu0 0.0
  %830 = vmatprep.subr.mxu0 0.0
  %831 = vmatpush1.msra.mxu0 0.0
  %832 = vmatprep.subr.mxu0 0.0
  %833 = vmatpush1.msra.mxu0 0.0
  %834 = vmatprep.subr.mxu0 0.0
  %835 = vmatpush1.msra.mxu0 0.0
  %836 = vmatprep.subr.mxu0 0.0
  %837 = vmatpush1.msra.mxu0 0.0
  %838 = vmatprep.subr.mxu0 0.0
  %839 = vmatpush1.msra.mxu0 0.0
  %840 = vmatprep.subr.mxu0 0.0
  %841 = vmatpush1.msra.mxu0 0.0
  %842 = vmatprep.subr.mxu0 0.0
  %843 = vmatpush1.msra.mxu0 0.0
  %844 = vmatprep.subr.mxu0 0.0
  %845 = vmatpush1.msra.mxu0 0.0
  %846 = vmatprep.subr.mxu0 0.0
  %847 = vmatpush1.msra.mxu0 0.0
  %848 = vmatprep.mubr.f32.mxu0 0.0
  %849 = vmatmul.mubr.f32.gmra.mrb[0].mxu0 %v782
  %v850 = vpop.f32.mrb[0].mxu0
  %v851 = vadd.f32 %v779, %v850
  %v852 = vpop.f32.mrb[0].mxu0
  %853 = vdwg.mxu0
  %vm854 = vcmp.gt.f32.partialorder %v851, 0.0
  %v855 = vmin.f32 %v851, 0.0
  %v856 = vmul.f32 %v855, 1.442695
  %v857 = vpow.pop %v856
  %v858 = vsub.f32 %v857, 1.0
  %v859 = vsel %vm854, %v851, %v858
  %v860 = vld [vmem:[%s12] sm:$0xff]
  %v861 = vld [vmem:[%s12 + $0x8] sm:$0xff]
  %v862 = vld [vmem:[%s12 + $0x10] sm:$0xff]
  %v863 = vld [vmem:[%s12 + $0x18] sm:$0xff]
  %v864 = vld [vmem:[%s13] sm:$0x1]
  %v866 = vlaneseq
  %v867 = vshrl.u32 %v866, 7
  %v868 = vsub.s32 0, %v867
  %v869 = vrot.slane %v864, %v868
  %v872 = vsel %vm690, %v859, 0
  %874 = vmatprep.subr.mxu0 0.0
  %875 = vmatpush1.msra.mxu0 %v860
  %876 = vmatprep.subr.mxu0 0.0
  %877 = vmatpush1.msra.mxu0 %v861
  %878 = vmatprep.subr.mxu0 0.0
  %879 = vmatpush1.msra.mxu0 %v862
  %880 = vmatprep.subr.mxu0 0.0
  %881 = vmatpush1.msra.mxu0 %v863
  %882 = vmatprep.subr.mxu0 0.0
  %883 = vmatpush1.msra.mxu0 0.0
  %884 = vmatprep.subr.mxu0 0.0
  %885 = vmatpush1.msra.mxu0 0.0
  %886 = vmatprep.subr.mxu0 0.0
  %887 = vmatpush1.msra.mxu0 0.0
  %888 = vmatprep.subr.mxu0 0.0
  %889 = vmatpush1.msra.mxu0 0.0
  %890 = vmatprep.subr.mxu0 0.0
  %891 = vmatpush1.msra.mxu0 0.0
  %892 = vmatprep.subr.mxu0 0.0
  %893 = vmatpush1.msra.mxu0 0.0
  %894 = vmatprep.subr.mxu0 0.0
  %895 = vmatpush1.msra.mxu0 0.0
  %896 = vmatprep.subr.mxu0 0.0
  %897 = vmatpush1.msra.mxu0 0.0
  %898 = vmatprep.subr.mxu0 0.0
  %899 = vmatpush1.msra.mxu0 0.0
  %900 = vmatprep.subr.mxu0 0.0
  %901 = vmatpush1.msra.mxu0 0.0
  %902 = vmatprep.subr.mxu0 0.0
  %903 = vmatpush1.msra.mxu0 0.0
  %904 = vmatprep.subr.mxu0 0.0
  %905 = vmatpush1.msra.mxu0 0.0
  %906 = vmatprep.subr.mxu0 0.0
  %907 = vmatpush1.msra.mxu0 0.0
  %908 = vmatprep.subr.mxu0 0.0
  %909 = vmatpush1.msra.mxu0 0.0
  %910 = vmatprep.subr.mxu0 0.0
  %911 = vmatpush1.msra.mxu0 0.0
  %912 = vmatprep.subr.mxu0 0.0
  %913 = vmatpush1.msra.mxu0 0.0
  %914 = vmatprep.subr.mxu0 0.0
  %915 = vmatpush1.msra.mxu0 0.0
  %916 = vmatprep.subr.mxu0 0.0
  %917 = vmatpush1.msra.mxu0 0.0
  %918 = vmatprep.subr.mxu0 0.0
  %919 = vmatpush1.msra.mxu0 0.0
  %920 = vmatprep.subr.mxu0 0.0
  %921 = vmatpush1.msra.mxu0 0.0
  %922 = vmatprep.subr.mxu0 0.0
  %923 = vmatpush1.msra.mxu0 0.0
  %924 = vmatprep.subr.mxu0 0.0
  %925 = vmatpush1.msra.mxu0 0.0
  %926 = vmatprep.subr.mxu0 0.0
  %927 = vmatpush1.msra.mxu0 0.0
  %928 = vmatprep.subr.mxu0 0.0
  %929 = vmatpush1.msra.mxu0 0.0
  %930 = vmatprep.subr.mxu0 0.0
  %931 = vmatpush1.msra.mxu0 0.0
  %932 = vmatprep.subr.mxu0 0.0
  %933 = vmatpush1.msra.mxu0 0.0
  %934 = vmatprep.subr.mxu0 0.0
  %935 = vmatpush1.msra.mxu0 0.0
  %936 = vmatprep.subr.mxu0 0.0
  %937 = vmatpush1.msra.mxu0 0.0
  %938 = vmatprep.mubr.f32.mxu0 0.0
  %939 = vmatmul.mubr.f32.gmra.mrb[0].mxu0 %v872
  %v940 = vpop.f32.mrb[0].mxu0
  %v941 = vadd.f32 %v869, %v940
  %v942 = vpop.f32.mrb[0].mxu0
  %943 = vdwg.mxu0
  %vm944 = vcmp.gt.f32.partialorder %v941, 0.0
  %v945 = vmin.f32 %v941, 0.0
  %v946 = vmul.f32 %v945, 1.442695
  %v947 = vpow.pop %v946
  %v948 = vsub.f32 %v947, 1.0
  %v949 = vsel %vm944, %v941, %v948
  %v950 = vld [vmem:[%s14] sm:$0xff]
  %v951 = vld [vmem:[%s14 + $0x8] sm:$0xff]
  %v952 = vld [vmem:[%s14 + $0x10] sm:$0xff]
  %v953 = vld [vmem:[%s14 + $0x18] sm:$0xff]
  %v954 = vld [vmem:[%s14 + $0x20] sm:$0xff]
  %v955 = vld [vmem:[%s14 + $0x28] sm:$0xff]
  %v956 = vld [vmem:[%s14 + $0x30] sm:$0xff]
  %v957 = vld [vmem:[%s14 + $0x38] sm:$0xff]
  %v958 = vld [vmem:[%s1] sm:$0x3]
  %v959 = vld [vmem:[%s15] sm:$0xff]
  %v960 = vld [vmem:[%s15 + $0x8] sm:$0xff]
  %vm961 = vcmask 64512
  %v963 = vsel %vm961, %v958, 0
  %965 = vmatprep.subr.mxu0 %v960
  %966 = vmatpush1.msra.mxu0 %v959
  %967 = vmatprep.subr.mxu0 0.0
  %968 = vmatpush1.msra.mxu0 0.0
  %969 = vmatprep.subr.mxu0 0.0
  %970 = vmatpush1.msra.mxu0 0.0
  %971 = vmatprep.subr.mxu0 0.0
  %972 = vmatpush1.msra.mxu0 0.0
  %973 = vmatprep.subr.mxu0 0.0
  %974 = vmatpush1.msra.mxu0 0.0
  %975 = vmatprep.subr.mxu0 0.0
  %976 = vmatpush1.msra.mxu0 0.0
  %977 = vmatprep.subr.mxu0 0.0
  %978 = vmatpush1.msra.mxu0 0.0
  %979 = vmatprep.subr.mxu0 0.0
  %980 = vmatpush1.msra.mxu0 0.0
  %981 = vmatprep.subr.mxu0 0.0
  %982 = vmatpush1.msra.mxu0 0.0
  %983 = vmatprep.subr.mxu0 0.0
  %984 = vmatpush1.msra.mxu0 0.0
  %985 = vmatprep.subr.mxu0 0.0
  %986 = vmatpush1.msra.mxu0 0.0
  %987 = vmatprep.subr.mxu0 0.0
  %988 = vmatpush1.msra.mxu0 0.0
  %989 = vmatprep.subr.mxu0 0.0
  %990 = vmatpush1.msra.mxu0 0.0
  %991 = vmatprep.subr.mxu0 0.0
  %992 = vmatpush1.msra.mxu0 0.0
  %993 = vmatprep.subr.mxu0 0.0
  %994 = vmatpush1.msra.mxu0 0.0
  %995 = vmatprep.subr.mxu0 0.0
  %996 = vmatpush1.msra.mxu0 0.0
  %997 = vmatprep.subr.mxu0 0.0
  %998 = vmatpush1.msra.mxu0 0.0
  %999 = vmatprep.subr.mxu0 0.0
  %1000 = vmatpush1.msra.mxu0 0.0
  %1001 = vmatprep.subr.mxu0 0.0
  %1002 = vmatpush1.msra.mxu0 0.0
  %1003 = vmatprep.subr.mxu0 0.0
  %1004 = vmatpush1.msra.mxu0 0.0
  %1005 = vmatprep.subr.mxu0 0.0
  %1006 = vmatpush1.msra.mxu0 0.0
  %1007 = vmatprep.subr.mxu0 0.0
  %1008 = vmatpush1.msra.mxu0 0.0
  %1009 = vmatprep.subr.mxu0 0.0
  %1010 = vmatpush1.msra.mxu0 0.0
  %1011 = vmatprep.subr.mxu0 0.0
  %1012 = vmatpush1.msra.mxu0 0.0
  %1013 = vmatprep.subr.mxu0 0.0
  %1014 = vmatpush1.msra.mxu0 0.0
  %1015 = vmatprep.subr.mxu0 0.0
  %1016 = vmatpush1.msra.mxu0 0.0
  %1017 = vmatprep.subr.mxu0 0.0
  %1018 = vmatpush1.msra.mxu0 0.0
  %1019 = vmatprep.subr.mxu0 0.0
  %1020 = vmatpush1.msra.mxu0 0.0
  %1021 = vmatprep.subr.mxu0 0.0
  %1022 = vmatpush1.msra.mxu0 0.0
  %1023 = vmatprep.subr.mxu0 0.0
  %1024 = vmatpush1.msra.mxu0 0.0
  %1025 = vmatprep.subr.mxu0 0.0
  %1026 = vmatpush1.msra.mxu0 0.0
  %1027 = vmatprep.subr.mxu0 0.0
  %1028 = vmatpush1.msra.mxu0 0.0
  %1029 = vmatprep.mubr.f32.mxu0 0.0
  %1030 = vmatmul.mubr.f32.gmra.mrb[0].mxu0 %v963
  %v1031 = vpop.f32.mrb[0].mxu0
  %v1032 = vadd.f32 0.0, %v1031
  %v1033 = vpop.f32.mrb[0].mxu0
  %v1034 = vadd.f32 0.0, %v1033
  %1035 = vdwg.mxu0
  %v1037 = vsel %vm690, %v949, 0
  %1039 = vmatprep.subr.mxu0 %v951
  %1040 = vmatpush1.msra.mxu0 %v950
  %1041 = vmatprep.subr.mxu0 %v953
  %1042 = vmatpush1.msra.mxu0 %v952
  %1043 = vmatprep.subr.mxu0 %v955
  %1044 = vmatpush1.msra.mxu0 %v954
  %1045 = vmatprep.subr.mxu0 %v957
  %1046 = vmatpush1.msra.mxu0 %v956
  %1047 = vmatprep.subr.mxu0 0.0
  %1048 = vmatpush1.msra.mxu0 0.0
  %1049 = vmatprep.subr.mxu0 0.0
  %1050 = vmatpush1.msra.mxu0 0.0
  %1051 = vmatprep.subr.mxu0 0.0
  %1052 = vmatpush1.msra.mxu0 0.0
  %1053 = vmatprep.subr.mxu0 0.0
  %1054 = vmatpush1.msra.mxu0 0.0
  %1055 = vmatprep.subr.mxu0 0.0
  %1056 = vmatpush1.msra.mxu0 0.0
  %1057 = vmatprep.subr.mxu0 0.0
  %1058 = vmatpush1.msra.mxu0 0.0
  %1059 = vmatprep.subr.mxu0 0.0
  %1060 = vmatpush1.msra.mxu0 0.0
  %1061 = vmatprep.subr.mxu0 0.0
  %1062 = vmatpush1.msra.mxu0 0.0
  %1063 = vmatprep.subr.mxu0 0.0
  %1064 = vmatpush1.msra.mxu0 0.0
  %1065 = vmatprep.subr.mxu0 0.0
  %1066 = vmatpush1.msra.mxu0 0.0
  %1067 = vmatprep.subr.mxu0 0.0
  %1068 = vmatpush1.msra.mxu0 0.0
  %1069 = vmatprep.subr.mxu0 0.0
  %1070 = vmatpush1.msra.mxu0 0.0
  %1071 = vmatprep.subr.mxu0 0.0
  %1072 = vmatpush1.msra.mxu0 0.0
  %1073 = vmatprep.subr.mxu0 0.0
  %1074 = vmatpush1.msra.mxu0 0.0
  %1075 = vmatprep.subr.mxu0 0.0
  %1076 = vmatpush1.msra.mxu0 0.0
  %1077 = vmatprep.subr.mxu0 0.0
  %1078 = vmatpush1.msra.mxu0 0.0
  %1079 = vmatprep.subr.mxu0 0.0
  %1080 = vmatpush1.msra.mxu0 0.0
  %1081 = vmatprep.subr.mxu0 0.0
  %1082 = vmatpush1.msra.mxu0 0.0
  %1083 = vmatprep.subr.mxu0 0.0
  %1084 = vmatpush1.msra.mxu0 0.0
  %1085 = vmatprep.subr.mxu0 0.0
  %1086 = vmatpush1.msra.mxu0 0.0
  %1087 = vmatprep.subr.mxu0 0.0
  %1088 = vmatpush1.msra.mxu0 0.0
  %1089 = vmatprep.subr.mxu0 0.0
  %1090 = vmatpush1.msra.mxu0 0.0
  %1091 = vmatprep.subr.mxu0 0.0
  %1092 = vmatpush1.msra.mxu0 0.0
  %1093 = vmatprep.subr.mxu0 0.0
  %1094 = vmatpush1.msra.mxu0 0.0
  %1095 = vmatprep.subr.mxu0 0.0
  %1096 = vmatpush1.msra.mxu0 0.0
  %1097 = vmatprep.subr.mxu0 0.0
  %1098 = vmatpush1.msra.mxu0 0.0
  %1099 = vmatprep.subr.mxu0 0.0
  %1100 = vmatpush1.msra.mxu0 0.0
  %1101 = vmatprep.subr.mxu0 0.0
  %1102 = vmatpush1.msra.mxu0 0.0
  %1103 = vmatprep.mubr.f32.mxu0 0.0
  %1104 = vmatmul.mubr.f32.gmra.mrb[0].mxu0 %v1037
  %v1105 = vpop.f32.mrb[0].mxu0
  %v1106 = vadd.f32 %v1032, %v1105
  %v1107 = vpop.f32.mrb[0].mxu0
  %v1108 = vadd.f32 %v1034, %v1107
  %1109 = vdwg.mxu0
  %v1110 = vld [vmem:[%s16] sm:$0x3]
  %v1112 = vlaneseq
  %v1113 = vshrl.u32 %v1112, 7
  %v1114 = vsub.s32 0, %v1113
  %v1115 = vrot.slane %v1110, %v1114
  %v1116 = vlaneseq
  %v1117 = vshrl.u32 %v1116, 7
  %v1118 = vsub.s32 1, %v1117
  %v1119 = vrot.slane %v1110, %v1118
  %v1122 = vadd.f32 %v1106, %v1115
  %v1123 = vadd.f32 %v1108, %v1119
  %v1124 = vmax.f32 %v1122, 0.0
  %v1125 = vmax.f32 %v1123, 0.0
  %v1126 = vld [vmem:[%s17] sm:$0xff]
  %v1127 = vld [vmem:[%s17 + $0x8] sm:$0xff]
  %v1128 = vld [vmem:[%s17 + $0x10] sm:$0xff]
  %v1129 = vld [vmem:[%s17 + $0x18] sm:$0xff]
  %v1130 = vld [vmem:[%s17 + $0x20] sm:$0xff]
  %v1131 = vld [vmem:[%s17 + $0x28] sm:$0xff]
  %v1132 = vld [vmem:[%s17 + $0x30] sm:$0xff]
  %v1133 = vld [vmem:[%s17 + $0x38] sm:$0xff]
  %v1134 = vld [vmem:[%s17 + $0x40] sm:$0xff]
  %v1135 = vld [vmem:[%s17 + $0x48] sm:$0xff]
  %v1136 = vld [vmem:[%s17 + $0x50] sm:$0xff]
  %v1137 = vld [vmem:[%s17 + $0x58] sm:$0xff]
  %v1138 = vld [vmem:[%s17 + $0x60] sm:$0xff]
  %v1139 = vld [vmem:[%s17 + $0x68] sm:$0xff]
  %v1140 = vld [vmem:[%s17 + $0x70] sm:$0xff]
  %v1141 = vld [vmem:[%s17 + $0x78] sm:$0xff]
  %v1142 = vld [vmem:[%s17 + $0x80] sm:$0xff]
  %v1143 = vld [vmem:[%s17 + $0x88] sm:$0xff]
  %v1144 = vld [vmem:[%s17 + $0x90] sm:$0xff]
  %v1145 = vld [vmem:[%s17 + $0x98] sm:$0xff]
  %v1146 = vld [vmem:[%s17 + $0xa0] sm:$0xff]
  %v1147 = vld [vmem:[%s17 + $0xa8] sm:$0xff]
  %v1148 = vld [vmem:[%s17 + $0xb0] sm:$0xff]
  %v1149 = vld [vmem:[%s17 + $0xb8] sm:$0xff]
  %v1150 = vld [vmem:[%s17 + $0xc0] sm:$0xff]
  %v1151 = vld [vmem:[%s17 + $0xc8] sm:$0xff]
  %v1152 = vld [vmem:[%s17 + $0xd0] sm:$0xff]
  %v1153 = vld [vmem:[%s17 + $0xd8] sm:$0xff]
  %v1154 = vld [vmem:[%s17 + $0xe0] sm:$0xff]
  %v1155 = vld [vmem:[%s17 + $0xe8] sm:$0xff]
  %v1156 = vld [vmem:[%s17 + $0xf0] sm:$0xff]
  %v1157 = vld [vmem:[%s17 + $0xf8] sm:$0xff]
  %v1158 = vld [vmem:[%s17 + $0x100] sm:$0xff]
  %v1159 = vld [vmem:[%s17 + $0x108] sm:$0xff]
  %v1160 = vld [vmem:[%s17 + $0x110] sm:$0xff]
  %v1161 = vld [vmem:[%s17 + $0x118] sm:$0xff]
  %v1162 = vld [vmem:[%s17 + $0x120] sm:$0xff]
  %v1163 = vld [vmem:[%s17 + $0x128] sm:$0xff]
  %v1164 = vld [vmem:[%s17 + $0x130] sm:$0xff]
  %v1165 = vld [vmem:[%s17 + $0x138] sm:$0xff]
  %v1166 = vld [vmem:[%s17 + $0x140] sm:$0xff]
  %v1167 = vld [vmem:[%s17 + $0x148] sm:$0xff]
  %v1168 = vld [vmem:[%s17 + $0x150] sm:$0xff]
  %v1169 = vld [vmem:[%s17 + $0x158] sm:$0xff]
  %v1170 = vld [vmem:[%s17 + $0x160] sm:$0xff]
  %v1171 = vld [vmem:[%s17 + $0x168] sm:$0xff]
  %v1172 = vld [vmem:[%s17 + $0x170] sm:$0xff]
  %v1173 = vld [vmem:[%s17 + $0x178] sm:$0xff]
  %v1174 = vld [vmem:[%s17 + $0x180] sm:$0xff]
  %v1175 = vld [vmem:[%s17 + $0x188] sm:$0xff]
  %v1176 = vld [vmem:[%s17 + $0x190] sm:$0xff]
  %v1177 = vld [vmem:[%s17 + $0x198] sm:$0xff]
  %v1178 = vld [vmem:[%s17 + $0x1a0] sm:$0xff]
  %v1179 = vld [vmem:[%s17 + $0x1a8] sm:$0xff]
  %v1180 = vld [vmem:[%s17 + $0x1b0] sm:$0xff]
  %v1181 = vld [vmem:[%s17 + $0x1b8] sm:$0xff]
  %v1182 = vld [vmem:[%s17 + $0x1c0] sm:$0xff]
  %v1183 = vld [vmem:[%s17 + $0x1c8] sm:$0xff]
  %v1184 = vld [vmem:[%s17 + $0x1d0] sm:$0xff]
  %v1185 = vld [vmem:[%s17 + $0x1d8] sm:$0xff]
  %v1186 = vld [vmem:[%s17 + $0x1e0] sm:$0xff]
  %v1187 = vld [vmem:[%s17 + $0x1e8] sm:$0xff]
  %v1188 = vld [vmem:[%s17 + $0x1f0] sm:$0xff]
  %v1189 = vld [vmem:[%s17 + $0x1f8] sm:$0xff]
  %v1190 = vld [vmem:[%s18] sm:$0x3]
  %v1192 = vlaneseq
  %v1193 = vshrl.u32 %v1192, 7
  %v1194 = vsub.s32 0, %v1193
  %v1195 = vrot.slane %v1190, %v1194
  %v1196 = vlaneseq
  %v1197 = vshrl.u32 %v1196, 7
  %v1198 = vsub.s32 1, %v1197
  %v1199 = vrot.slane %v1190, %v1198
  %1202 = vmatprep.subr.mxu0 %v1127
  %1203 = vmatpush1.msra.mxu0 %v1126
  %1204 = vmatprep.subr.mxu0 %v1129
  %1205 = vmatpush1.msra.mxu0 %v1128
  %1206 = vmatprep.subr.mxu0 %v1131
  %1207 = vmatpush1.msra.mxu0 %v1130
  %1208 = vmatprep.subr.mxu0 %v1133
  %1209 = vmatpush1.msra.mxu0 %v1132
  %1210 = vmatprep.subr.mxu0 %v1135
  %1211 = vmatpush1.msra.mxu0 %v1134
  %1212 = vmatprep.subr.mxu0 %v1137
  %1213 = vmatpush1.msra.mxu0 %v1136
  %1214 = vmatprep.subr.mxu0 %v1139
  %1215 = vmatpush1.msra.mxu0 %v1138
  %1216 = vmatprep.subr.mxu0 %v1141
  %1217 = vmatpush1.msra.mxu0 %v1140
  %1218 = vmatprep.subr.mxu0 %v1143
  %1219 = vmatpush1.msra.mxu0 %v1142
  %1220 = vmatprep.subr.mxu0 %v1145
  %1221 = vmatpush1.msra.mxu0 %v1144
  %1222 = vmatprep.subr.mxu0 %v1147
  %1223 = vmatpush1.msra.mxu0 %v1146
  %1224 = vmatprep.subr.mxu0 %v1149
  %1225 = vmatpush1.msra.mxu0 %v1148
  %1226 = vmatprep.subr.mxu0 %v1151
  %1227 = vmatpush1.msra.mxu0 %v1150
  %1228 = vmatprep.subr.mxu0 %v1153
  %1229 = vmatpush1.msra.mxu0 %v1152
  %1230 = vmatprep.subr.mxu0 %v1155
  %1231 = vmatpush1.msra.mxu0 %v1154
  %1232 = vmatprep.subr.mxu0 %v1157
  %1233 = vmatpush1.msra.mxu0 %v1156
  %1234 = vmatprep.subr.mxu0 %v1159
  %1235 = vmatpush1.msra.mxu0 %v1158
  %1236 = vmatprep.subr.mxu0 %v1161
  %1237 = vmatpush1.msra.mxu0 %v1160
  %1238 = vmatprep.subr.mxu0 %v1163
  %1239 = vmatpush1.msra.mxu0 %v1162
  %1240 = vmatprep.subr.mxu0 %v1165
  %1241 = vmatpush1.msra.mxu0 %v1164
  %1242 = vmatprep.subr.mxu0 %v1167
  %1243 = vmatpush1.msra.mxu0 %v1166
  %1244 = vmatprep.subr.mxu0 %v1169
  %1245 = vmatpush1.msra.mxu0 %v1168
  %1246 = vmatprep.subr.mxu0 %v1171
  %1247 = vmatpush1.msra.mxu0 %v1170
  %1248 = vmatprep.subr.mxu0 %v1173
  %1249 = vmatpush1.msra.mxu0 %v1172
  %1250 = vmatprep.subr.mxu0 %v1175
  %1251 = vmatpush1.msra.mxu0 %v1174
  %1252 = vmatprep.subr.mxu0 %v1177
  %1253 = vmatpush1.msra.mxu0 %v1176
  %1254 = vmatprep.subr.mxu0 %v1179
  %1255 = vmatpush1.msra.mxu0 %v1178
  %1256 = vmatprep.subr.mxu0 %v1181
  %1257 = vmatpush1.msra.mxu0 %v1180
  %1258 = vmatprep.subr.mxu0 %v1183
  %1259 = vmatpush1.msra.mxu0 %v1182
  %1260 = vmatprep.subr.mxu0 %v1185
  %1261 = vmatpush1.msra.mxu0 %v1184
  %1262 = vmatprep.subr.mxu0 %v1187
  %1263 = vmatpush1.msra.mxu0 %v1186
  %1264 = vmatprep.subr.mxu0 %v1189
  %1265 = vmatpush1.msra.mxu0 %v1188
  %1266 = vmatprep.mubr.f32.mxu0 %v1125
  %1267 = vmatmul.mubr.f32.gmra.mrb[0].mxu0 %v1124
  %v1268 = vpop.f32.mrb[0].mxu0
  %v1269 = vadd.f32 %v1195, %v1268
  %v1270 = vpop.f32.mrb[0].mxu0
  %v1271 = vadd.f32 %v1199, %v1270
  %1272 = vdwg.mxu0
  %v1273 = vmax.f32 %v1269, 0.0
  %v1274 = vmax.f32 %v1271, 0.0
  %v1275 = vld [vmem:[%s19] sm:$0xff]
  %v1276 = vld [vmem:[%s19 + $0x8] sm:$0xff]
  %v1277 = vld [vmem:[%s19 + $0x10] sm:$0xff]
  %v1278 = vld [vmem:[%s19 + $0x18] sm:$0xff]
  %v1279 = vld [vmem:[%s19 + $0x20] sm:$0xff]
  %v1280 = vld [vmem:[%s19 + $0x28] sm:$0xff]
  %v1281 = vld [vmem:[%s19 + $0x30] sm:$0xff]
  %v1282 = vld [vmem:[%s19 + $0x38] sm:$0xff]
  %v1283 = vld [vmem:[%s19 + $0x40] sm:$0xff]
  %v1284 = vld [vmem:[%s19 + $0x48] sm:$0xff]
  %v1285 = vld [vmem:[%s19 + $0x50] sm:$0xff]
  %v1286 = vld [vmem:[%s19 + $0x58] sm:$0xff]
  %v1287 = vld [vmem:[%s19 + $0x60] sm:$0xff]
  %v1288 = vld [vmem:[%s19 + $0x68] sm:$0xff]
  %v1289 = vld [vmem:[%s19 + $0x70] sm:$0xff]
  %v1290 = vld [vmem:[%s19 + $0x78] sm:$0xff]
  %v1291 = vld [vmem:[%s19 + $0x80] sm:$0xff]
  %v1292 = vld [vmem:[%s19 + $0x88] sm:$0xff]
  %v1293 = vld [vmem:[%s19 + $0x90] sm:$0xff]
  %v1294 = vld [vmem:[%s19 + $0x98] sm:$0xff]
  %v1295 = vld [vmem:[%s19 + $0xa0] sm:$0xff]
  %v1296 = vld [vmem:[%s19 + $0xa8] sm:$0xff]
  %v1297 = vld [vmem:[%s19 + $0xb0] sm:$0xff]
  %v1298 = vld [vmem:[%s19 + $0xb8] sm:$0xff]
  %v1299 = vld [vmem:[%s19 + $0xc0] sm:$0xff]
  %v1300 = vld [vmem:[%s19 + $0xc8] sm:$0xff]
  %v1301 = vld [vmem:[%s19 + $0xd0] sm:$0xff]
  %v1302 = vld [vmem:[%s19 + $0xd8] sm:$0xff]
  %v1303 = vld [vmem:[%s19 + $0xe0] sm:$0xff]
  %v1304 = vld [vmem:[%s19 + $0xe8] sm:$0xff]
  %v1305 = vld [vmem:[%s19 + $0xf0] sm:$0xff]
  %v1306 = vld [vmem:[%s19 + $0xf8] sm:$0xff]
  %v1307 = vld [vmem:[%s20] sm:$0x1]
  %v1309 = vlaneseq
  %v1310 = vshrl.u32 %v1309, 7
  %v1311 = vsub.s32 0, %v1310
  %v1312 = vrot.slane %v1307, %v1311
  %1314 = vmatprep.subr.mxu0 0.0
  %1315 = vmatpush1.msra.mxu0 %v1275
  %1316 = vmatprep.subr.mxu0 0.0
  %1317 = vmatpush1.msra.mxu0 %v1276
  %1318 = vmatprep.subr.mxu0 0.0
  %1319 = vmatpush1.msra.mxu0 %v1277
  %1320 = vmatprep.subr.mxu0 0.0
  %1321 = vmatpush1.msra.mxu0 %v1278
  %1322 = vmatprep.subr.mxu0 0.0
  %1323 = vmatpush1.msra.mxu0 %v1279
  %1324 = vmatprep.subr.mxu0 0.0
  %1325 = vmatpush1.msra.mxu0 %v1280
  %1326 = vmatprep.subr.mxu0 0.0
  %1327 = vmatpush1.msra.mxu0 %v1281
  %1328 = vmatprep.subr.mxu0 0.0
  %1329 = vmatpush1.msra.mxu0 %v1282
  %1330 = vmatprep.subr.mxu0 0.0
  %1331 = vmatpush1.msra.mxu0 %v1283
  %1332 = vmatprep.subr.mxu0 0.0
  %1333 = vmatpush1.msra.mxu0 %v1284
  %1334 = vmatprep.subr.mxu0 0.0
  %1335 = vmatpush1.msra.mxu0 %v1285
  %1336 = vmatprep.subr.mxu0 0.0
  %1337 = vmatpush1.msra.mxu0 %v1286
  %1338 = vmatprep.subr.mxu0 0.0
  %1339 = vmatpush1.msra.mxu0 %v1287
  %1340 = vmatprep.subr.mxu0 0.0
  %1341 = vmatpush1.msra.mxu0 %v1288
  %1342 = vmatprep.subr.mxu0 0.0
  %1343 = vmatpush1.msra.mxu0 %v1289
  %1344 = vmatprep.subr.mxu0 0.0
  %1345 = vmatpush1.msra.mxu0 %v1290
  %1346 = vmatprep.subr.mxu0 0.0
  %1347 = vmatpush1.msra.mxu0 %v1291
  %1348 = vmatprep.subr.mxu0 0.0
  %1349 = vmatpush1.msra.mxu0 %v1292
  %1350 = vmatprep.subr.mxu0 0.0
  %1351 = vmatpush1.msra.mxu0 %v1293
  %1352 = vmatprep.subr.mxu0 0.0
  %1353 = vmatpush1.msra.mxu0 %v1294
  %1354 = vmatprep.subr.mxu0 0.0
  %1355 = vmatpush1.msra.mxu0 %v1295
  %1356 = vmatprep.subr.mxu0 0.0
  %1357 = vmatpush1.msra.mxu0 %v1296
  %1358 = vmatprep.subr.mxu0 0.0
  %1359 = vmatpush1.msra.mxu0 %v1297
  %1360 = vmatprep.subr.mxu0 0.0
  %1361 = vmatpush1.msra.mxu0 %v1298
  %1362 = vmatprep.subr.mxu0 0.0
  %1363 = vmatpush1.msra.mxu0 %v1299
  %1364 = vmatprep.subr.mxu0 0.0
  %1365 = vmatpush1.msra.mxu0 %v1300
  %1366 = vmatprep.subr.mxu0 0.0
  %1367 = vmatpush1.msra.mxu0 %v1301
  %1368 = vmatprep.subr.mxu0 0.0
  %1369 = vmatpush1.msra.mxu0 %v1302
  %1370 = vmatprep.subr.mxu0 0.0
  %1371 = vmatpush1.msra.mxu0 %v1303
  %1372 = vmatprep.subr.mxu0 0.0
  %1373 = vmatpush1.msra.mxu0 %v1304
  %1374 = vmatprep.subr.mxu0 0.0
  %1375 = vmatpush1.msra.mxu0 %v1305
  %1376 = vmatprep.subr.mxu0 0.0
  %1377 = vmatpush1.msra.mxu0 %v1306
  %1378 = vmatprep.mubr.f32.mxu0 %v1274
  %1379 = vmatmul.mubr.f32.gmra.mrb[0].mxu0 %v1273
  %v1380 = vpop.f32.mrb[0].mxu0
  %v1381 = vadd.f32 %v1312, %v1380
  %v1382 = vpop.f32.mrb[0].mxu0
  %1383 = vdwg.mxu0
  %v1384 = vlaneseq
  %v1385 = vand.u32 %v1384, 127
  %vm1386 = vcmp.lt.s32.totalorder %v1385, 7
  %v1387 = vsel %vm1386, %v1381, -inf
  %vm1388 = vcmask 58368
  %v1389 = vsel %vm1388, %v1387, -inf
  %1390 = vmax.xlane.f32.xlu0 %v1389
  %v1391 = vpop.xlane.xlu0 %1390
  %v1392 = vsub.f32 %v1381, %v1391
  %v1393 = vmul.f32 %v1392, 1.442695
  %v1394 = vpow.pop %v1393
  %v1395 = vsel %vm1386, %v1394, 0.0
  %v1396 = vsel %vm1388, %v1395, 0.0
  %1397 = vadd.xlane.f32.xlu0 %v1396
  %v1398 = vpop.xlane.xlu0 %1397
  %v1399 = vlog2.pop %v1398
  %v1400 = vmul.f32 %v1399, 0.6931472
  %v1401 = vsub.f32 %v1392, %v1400
  %v1402 = vsel %vm1386, %v1401, %v1381
  %1403 = vst.msk [vmem:[%s21] sm:$0x3] %vm1388, %v1402
  // Predicated region
  $region86: #{amigo_forward.1} parent=0 // pred_check
    _
  $region87: #{amigo_forward.1} parent=0 // pred_check_branch
    %1405 = sbr.rel (0) target = $region89
  $region88: #{amigo_forward.1} parent=0 // pred_region
    _
  $region89: #{amigo_forward.1} parent=0 // pred_fallthru
    _
  // Predicated region
  $region90: #{amigo_forward.1} parent=0 // pred_check
    _
  $region91: #{amigo_forward.1} parent=0 // pred_check_branch
    %1407 = sbr.rel (0) target = $region93
  $region92: #{amigo_forward.1} parent=0 // pred_region
    _
  $region93: #{amigo_forward.1} parent=0 // pred_fallthru
    _

</llo_original>
